<compile_context>
chip_gen: v7x
topology: tpu7x:2x2x1
jax: 0.10.0
libtpu: 0.0.40
codegen_flags: <defaults>
</compile_context>

<pallas_src>
import math
from functools import partial

import jax
import jax.numpy as jnp
from jax.experimental import pallas as pl
from jax.experimental.pallas import tpu as pltpu

LN_EPS = 1e-5


def decoder_layer_kernel(x_ref, bias_ref, wqkv_ref, bqkv_ref, wp_ref, bp_ref,
                         gamma_ref, beta_ref, o_ref, *, num_heads, batch_block,
                         seq_len):
    """One grid step == `batch_block` batch elements, rows flattened to (R, D)."""
    H, B, T = num_heads, batch_block, seq_len
    x = x_ref[...]                               # (R, D) f32, rows ordered (b, t)
    R, D = x.shape
    hd = D // H
    X = H * B                                    # batched (head, batch) attention problems
    cdt = wqkv_ref.dtype                         # matmul operand dtype (bf16 on v6e/v7x)

    # ---- fused QKV projection: ONE (R, D) @ (D, 3D) MXU matmul, f32 accumulation.
    #      The 1/sqrt(hd) query scale is already folded into wqkv/bqkv host-side.
    xc = x.astype(cdt)
    qkv = jnp.dot(xc, wqkv_ref[...], preferred_element_type=jnp.float32) + bqkv_ref[...]

    # ---- head split: a single relayout pass in bf16 (cast BEFORE moving data),
    #      not H separate f32 slice+stack passes per projection.  Static lane
    #      slices + stack on a NEW leading axis are used (instead of a
    #      lane-splitting reshape + second-minor transpose) because they lower
    #      robustly in Mosaic for hd < 128; the leading-dim reshapes are free.
    qkv_c = qkv.astype(cdt)                                           # (R, 3D) bf16
    slabs = [qkv_c[:, m * hd:(m + 1) * hd] for m in range(3 * H)]     # 3H x (R, hd)
    qkv_hm = jnp.stack(slabs, axis=0).reshape(3, H * B, T, hd)        # m = g*H + h
    q_hm, k_hm, v_hm = qkv_hm[0], qkv_hm[1], qkv_hm[2]                # (X, T, hd), x = h*B + b

    # ---- scores + softmax + P@V, batched over all (head, batch) pairs.
    #      bias_ref is the host-precomputed additive mask (0 / -1e30).  It MUST stay
    #      f32: cast to bf16 it overflows to -inf and NaNs after exp/renorm.
    # TODO(synk): for realistic T, tile T_kv on an "arbitrary" grid axis with online
    #             softmax (flash-style) instead of the full (X, T, T) f32 score tile.
    # TODO(synk): if a bundle dump shows the XLU saturating on v6e/v7x, feed K
    #             pre-transposed (X, hd, T) instead of letting the einsum handle it.
    s = jnp.einsum('xte,xse->xts', q_hm, k_hm,
                   preferred_element_type=jnp.float32) + bias_ref[...][None]   # (X, T, T)
    # Fully-masked rows degenerate to a uniform softmax (matches the reference; a
    # deliberate semantic choice, not an accident).
    s = s - jnp.max(s, axis=-1, keepdims=True)
    p = jnp.exp(s)
    l = jnp.sum(p, axis=-1, keepdims=True)                                     # (X, T, 1)
    # EUP approx reciprocal + bf16 matmul operands => bf16-scale (1e-2) tolerance.
    inv_l = pl.reciprocal(l, approx=True)

    o = jnp.einsum('xts,xse->xte', p.astype(cdt), v_hm,
                   preferred_element_type=jnp.float32) * inv_l                 # (X, T, hd) f32
    # attn_drop / dropout_self are identity (module in eval mode).
    # TODO(synk): training-mode stochastic dropout (pltpu.prng_*) is not modeled.

    # ---- merge heads (one bf16 lane-concat pass) + a single full-K output
    #      projection: (R, D) @ (D, D), so the per-head accumulation happens inside
    #      the MXU f32 accumulator instead of per-head matmuls + VPU adds.
    o_hb = o.astype(cdt).reshape(H, R, hd)                           # free leading reshape
    attn = jnp.concatenate([o_hb[h] for h in range(H)], axis=-1)     # (R, D), lane = h*hd + e
    y = jnp.dot(attn, wp_ref[...], preferred_element_type=jnp.float32) + bp_ref[...]

    # ---- residual + LayerNorm, all in f32.
    z = y + x
    mu = jnp.mean(z, axis=-1, keepdims=True)
    var = jnp.mean((z - mu) ** 2, axis=-1, keepdims=True)
    zn = (z - mu) * jax.lax.rsqrt(var + LN_EPS)
    o_ref[...] = (zn * gamma_ref[...] + beta_ref[...]).astype(o_ref.dtype)


def _vmem_capacity_bytes(default=64 * 1024 * 1024):
    """Physical VMEM per core (128 MiB on v5e/v6e, 64 MiB on v7x); conservative default."""
    try:
        info = pltpu.get_tpu_info()
        return int(getattr(info, "vmem_capacity_bytes", default))
    except Exception:
        return default


def _pick_batch_block(n_batch, seq_len, embed_dim, num_heads, vmem_limit_bytes,
                      rows_target=256):
    """Pick how many batch elements to pack per grid step.

    Targets >= `rows_target` rows so the 256-wide MXU on v6e/v7x is filled and the
    ~0.35us/step grid overhead is amortized (128 already suffices on v5e), but
    budgets against VMEM (single-buffered bf16 weights + the f32 score tensor
    X*T*T*4, the usual limiter) and keeps >= 2 grid steps when possible so both
    v7x TensorCores get parallel work.
    """
    weight_bytes = 8 * embed_dim * embed_dim + 4 * seq_len * seq_len + 16 * embed_dim
    budget = int(0.6 * vmem_limit_bytes) - weight_bytes

    def step_bytes(b):
        rows = b * seq_len
        io = 2 * 2 * rows * embed_dim * 4                    # x + out blocks, double-buffered f32
        proj = rows * 3 * embed_dim * (4 + 2 + 2)            # qkv f32 + bf16 copy + head-major bf16
        scores = 2 * b * num_heads * seq_len * seq_len * 4   # s and p, f32
        return io + proj + scores

    b = max(1, min(n_batch, max(1, rows_target // max(seq_len, 1))))
    while b > 1 and step_bytes(b) > budget:
        b -= 1
    while n_batch % b:
        b -= 1
    while b > 1 and n_batch // b < 2:     # keep >= 2 grid steps (v7x megacore)
        b -= 1
        while n_batch % b:
            b -= 1
    return max(b, 1)


def transformer_decoder_layer(tgt, tgt_mask, params, num_heads,
                              matmul_dtype=jnp.bfloat16, batch_block=None,
                              rows_target=256):
    """TransformerDecoderLayer forward: LayerNorm(tgt + SelfAttn(tgt, tgt_mask)).

    Matmul operands are cast to `matmul_dtype` (bf16 -> MXU fast path on v6e/v7x,
    halves weight VMEM); softmax / mask bias / LayerNorm math stays f32.
    """
    N, T, D = tgt.shape
    assert D % num_heads == 0
    hd = D // num_heads

    # ---- generation-aware VMEM budget (128 MiB v5e/v6e vs 64 MiB v7x).
    vmem_cap = _vmem_capacity_bytes()
    vmem_limit = max(32 * 1024 * 1024, min(int(0.75 * vmem_cap), 100 * 1024 * 1024))

    if batch_block is None:
        batch_block = _pick_batch_block(N, T, D, num_heads, vmem_limit, rows_target)
    assert N % batch_block == 0
    rows = batch_block * T

    # ---- one-off host-side (XLA) parameter prep:
    #  * fold 1/sqrt(hd) into the query projection (exact for power-of-two head dims,
    #    since the scale is then a power of two and commutes with the bf16 cast)
    #  * fuse Wq|Wk|Wv -> (D, 3D) so the kernel issues a single QKV matmul
    #  * precompute the additive mask bias (0 / -1e30, kept f32) so the kernel skips
    #    the per-step compare+select
    scale = 1.0 / math.sqrt(hd)
    wqkv = jnp.concatenate([params["wq"] * scale, params["wk"], params["wv"]],
                           axis=1).astype(matmul_dtype)
    bqkv = jnp.concatenate([params["bq"] * scale, params["bk"], params["bv"]],
                           axis=1).astype(jnp.float32)
    wp = params["wp"].astype(matmul_dtype)
    bias = jnp.where(tgt_mask > 0, 0.0, -1e30).astype(jnp.float32)
    x2 = tgt.reshape(N * T, D)

    kernel = partial(decoder_layer_kernel, num_heads=num_heads,
                     batch_block=batch_block, seq_len=T)
    args = (x2, bias, wqkv, bqkv, wp, params["bp"], params["gamma"], params["beta"])

    def build_call(single_buffer_consts):
        def const_spec(shape):
            # Constant index_map -> block never re-fetched; Buffered(1) keeps a single
            # resident copy instead of the default double buffer (halves weight VMEM).
            kw = {"pipeline_mode": pl.Buffered(1)} if single_buffer_consts else {}
            return pl.BlockSpec(shape, lambda i: (0,) * len(shape), **kw)

        in_specs = [
            pl.BlockSpec((rows, D), lambda i: (i, 0)),       # x rows (double-buffered)
            const_spec((T, T)),                              # additive mask bias (f32)
            const_spec((D, 3 * D)), const_spec((1, 3 * D)),  # fused Wqkv, bqkv
            const_spec((D, D)), const_spec((1, D)),          # Wproj, bproj
            const_spec((1, D)), const_spec((1, D)),          # gamma, beta
        ]
        # TODO(synk): for D >= ~2K on v7x (64 MiB VMEM) tile the QKV / proj contraction
        #             on an extra "arbitrary" grid axis with an f32 accumulator instead
        #             of holding the full (D, 3D) + (D, D) weights resident.
        return pl.pallas_call(
            kernel,
            out_shape=jax.ShapeDtypeStruct((N * T, D), tgt.dtype),
            grid=(N // batch_block,),
            in_specs=in_specs,
            out_specs=pl.BlockSpec((rows, D), lambda i: (i, 0)),
            compiler_params=pltpu.CompilerParams(
                dimension_semantics=("parallel",),
                vmem_limit_bytes=vmem_limit),
        )

    try:
        out2 = build_call(True)(*args)
    except Exception:
        # Fallback for jax versions where pipeline_mode on top-level pallas_call specs
        # is unsupported; identical math, just default double-buffered constants.
        out2 = build_call(False)(*args)

    return out2.reshape(N, T, D)


def reference_jax(tgt, mask, params, num_heads, matmul_dtype=jnp.bfloat16):
    """Plain-JAX reference with the same precision choices (bf16 matmul operands,
    f32 accumulation / softmax / LayerNorm) for a tight correctness check."""
    N, T, D = tgt.shape
    H = num_heads
    hd = D // H
    scale = 1.0 / math.sqrt(hd)
    cdt = matmul_dtype

    x = tgt.reshape(N * T, D)
    xc = x.astype(cdt)

    def proj(wname, bname):
        return jnp.dot(xc, params[wname].astype(cdt),
                       preferred_element_type=jnp.float32) + params[bname]

    q = proj("wq", "bq") * scale
    k = proj("wk", "bk")
    v = proj("wv", "bv")

    def heads(t):  # (N*T, D) -> (N, H, T, hd)
        return t.reshape(N, T, H, hd).transpose(0, 2, 1, 3).astype(cdt)

    qh, kh, vh = heads(q), heads(k), heads(v)
    s = jnp.einsum("nhte,nhse->nhts", qh, kh, preferred_element_type=jnp.float32)
    s = s + jnp.where(mask[None, None] > 0, 0.0, -1e30)
    s = s - s.max(-1, keepdims=True)
    p = jnp.exp(s)
    l = p.sum(-1, keepdims=True)
    o = jnp.einsum("nhts,nhse->nhte", p.astype(cdt), vh,
                   preferred_element_type=jnp.float32) / l             # (N, H, T, hd)

    attn = o.transpose(0, 2, 1, 3).reshape(N * T, D)
    y = jnp.dot(attn.astype(cdt), params["wp"].astype(cdt),
                preferred_element_type=jnp.float32) + params["bp"]
    z = y + x
    mu = z.mean(-1, keepdims=True)
    var = ((z - mu) ** 2).mean(-1, keepdims=True)
    out = (z - mu) / jnp.sqrt(var + LN_EPS) * params["gamma"] + params["beta"]
    return out.reshape(N, T, D)


def init_params(key, embed_dim):
    ks = jax.random.split(key, 10)
    bound = 1.0 / math.sqrt(embed_dim)

    def lin(kw, kb):
        w = jax.random.uniform(kw, (embed_dim, embed_dim), jnp.float32, -bound, bound)
        b = jax.random.uniform(kb, (1, embed_dim), jnp.float32, -bound, bound)
        return w, b

    wq, bq = lin(ks[0], ks[1])
    wk, bk = lin(ks[2], ks[3])
    wv, bv = lin(ks[4], ks[5])
    wp, bp = lin(ks[6], ks[7])
    gamma = jax.random.uniform(ks[8], (1, embed_dim), jnp.float32, 0.5, 1.5)
    beta = 0.1 * jax.random.normal(ks[9], (1, embed_dim), jnp.float32)
    return dict(wq=wq, bq=bq, wk=wk, bk=bk, wv=wv, bv=bv, wp=wp, bp=bp,
                gamma=gamma, beta=beta)


if __name__ == "__main__":
    N, T, D, H = 2, 8, 32, 2

    key = jax.random.PRNGKey(0)
    k_x, k_p = jax.random.split(key)

    tgt = jax.random.normal(k_x, (N, T, D), jnp.float32)
    tgt_mask = jnp.tril(jnp.ones((T, T), jnp.float32))   # causal mask, 0 => masked
    params = init_params(k_p, D)

    out = transformer_decoder_layer(tgt, tgt_mask, params, num_heads=H)
    out = jax.block_until_ready(out)

    ref = reference_jax(tgt, tgt_mask, params, num_heads=H)
    assert out.shape == (N, T, D)
    # bf16 matmul operands + EUP approx reciprocal => bf16-scale tolerance.
    assert jnp.allclose(out, ref, atol=1e-2, rtol=1e-2), "mismatch vs JAX reference"

    print("KERNEL_OK")
</pallas_src>

<mosaic_0001>
module attributes {stable_mosaic.version = 11 : i64} {
  func.func @decoder_layer_kernel(%arg0: i32, %arg1: memref<8x32xf32, #tpu.memory_space<vmem>>, %arg2: memref<8x8xf32, #tpu.memory_space<vmem>>, %arg3: memref<32x96xbf16, #tpu.memory_space<vmem>>, %arg4: memref<1x96xf32, #tpu.memory_space<vmem>>, %arg5: memref<32x32xbf16, #tpu.memory_space<vmem>>, %arg6: memref<1x32xf32, #tpu.memory_space<vmem>>, %arg7: memref<1x32xf32, #tpu.memory_space<vmem>>, %arg8: memref<1x32xf32, #tpu.memory_space<vmem>>, %arg9: memref<8x32xf32, #tpu.memory_space<vmem>>) attributes {dimension_semantics = [#tpu.dimension_semantics<parallel>], iteration_bounds = array<i64: 2>, scalar_prefetch = 0 : i64, scratch_operands = 0 : i64, tpu.core_type = #tpu.core_type<tc>, window_params = [{transform_indices = @transform_0, window_bounds = array<i64: 8, 32>}, {pipeline_mode = #tpu.pipeline_mode<synchronous>, transform_indices = @transform_1, window_bounds = array<i64: 8, 8>}, {pipeline_mode = #tpu.pipeline_mode<synchronous>, transform_indices = @transform_2, window_bounds = array<i64: 32, 96>}, {pipeline_mode = #tpu.pipeline_mode<synchronous>, transform_indices = @transform_3, window_bounds = array<i64: 1, 96>}, {pipeline_mode = #tpu.pipeline_mode<synchronous>, transform_indices = @transform_4, window_bounds = array<i64: 32, 32>}, {pipeline_mode = #tpu.pipeline_mode<synchronous>, transform_indices = @transform_5, window_bounds = array<i64: 1, 32>}, {pipeline_mode = #tpu.pipeline_mode<synchronous>, transform_indices = @transform_6, window_bounds = array<i64: 1, 32>}, {pipeline_mode = #tpu.pipeline_mode<synchronous>, transform_indices = @transform_7, window_bounds = array<i64: 1, 32>}, {transform_indices = @transform_8, window_bounds = array<i64: 8, 32>}]} {
    %c0 = arith.constant 0 : index
    %c0_0 = arith.constant 0 : index
    %0 = vector.load %arg1[%c0, %c0_0] : memref<8x32xf32, #tpu.memory_space<vmem>>, vector<8x32xf32>
    %1 = arith.truncf %0 : vector<8x32xf32> to vector<8x32xbf16>
    %c0_1 = arith.constant 0 : index
    %c0_2 = arith.constant 0 : index
    %2 = vector.load %arg3[%c0_1, %c0_2] : memref<32x96xbf16, #tpu.memory_space<vmem>>, vector<32x96xbf16>
    %cst = arith.constant dense<0.000000e+00> : vector<8x96xf32>
    %3 = tpu.matmul %1, %2, %cst {dimension_numbers = #tpu.dot_dimension_numbers<[1], [0], [0], [1], [0, 0, 1, 1], [], []>} : vector<8x32xbf16>, vector<32x96xbf16>, vector<8x96xf32> -> vector<8x96xf32>
    %c0_3 = arith.constant 0 : index
    %c0_4 = arith.constant 0 : index
    %4 = vector.load %arg4[%c0_3, %c0_4] : memref<1x96xf32, #tpu.memory_space<vmem>>, vector<1x96xf32>
    %5 = vector.broadcast %4 : vector<1x96xf32> to vector<8x96xf32>
    %6 = arith.addf %3, %5 : vector<8x96xf32>
    %7 = arith.truncf %6 : vector<8x96xf32> to vector<8x96xbf16>
    %8 = vector.extract_strided_slice %7 {offsets = [0, 0], sizes = [8, 16], strides = [1, 1]} : vector<8x96xbf16> to vector<8x16xbf16>
    %9 = vector.extract_strided_slice %7 {offsets = [0, 16], sizes = [8, 16], strides = [1, 1]} : vector<8x96xbf16> to vector<8x16xbf16>
    %10 = vector.extract_strided_slice %7 {offsets = [0, 32], sizes = [8, 16], strides = [1, 1]} : vector<8x96xbf16> to vector<8x16xbf16>
    %11 = vector.extract_strided_slice %7 {offsets = [0, 48], sizes = [8, 16], strides = [1, 1]} : vector<8x96xbf16> to vector<8x16xbf16>
    %12 = vector.extract_strided_slice %7 {offsets = [0, 64], sizes = [8, 16], strides = [1, 1]} : vector<8x96xbf16> to vector<8x16xbf16>
    %13 = vector.extract_strided_slice %7 {offsets = [0, 80], sizes = [8, 16], strides = [1, 1]} : vector<8x96xbf16> to vector<8x16xbf16>
    %14 = vector.shape_cast %8 : vector<8x16xbf16> to vector<1x8x16xbf16>
    %15 = vector.shape_cast %9 : vector<8x16xbf16> to vector<1x8x16xbf16>
    %16 = vector.shape_cast %10 : vector<8x16xbf16> to vector<1x8x16xbf16>
    %17 = vector.shape_cast %11 : vector<8x16xbf16> to vector<1x8x16xbf16>
    %18 = vector.shape_cast %12 : vector<8x16xbf16> to vector<1x8x16xbf16>
    %19 = vector.shape_cast %13 : vector<8x16xbf16> to vector<1x8x16xbf16>
    %20 = tpu.concatenate %14, %15, %16, %17, %18, %19 in 0 : vector<1x8x16xbf16>, vector<1x8x16xbf16>, vector<1x8x16xbf16>, vector<1x8x16xbf16>, vector<1x8x16xbf16>, vector<1x8x16xbf16> -> vector<6x8x16xbf16>
    %21 = vector.shape_cast %20 : vector<6x8x16xbf16> to vector<3x2x8x16xbf16>
    %22 = vector.extract_strided_slice %21 {offsets = [0, 0, 0, 0], sizes = [1, 2, 8, 16], strides = [1, 1, 1, 1]} : vector<3x2x8x16xbf16> to vector<1x2x8x16xbf16>
    %23 = vector.shape_cast %22 : vector<1x2x8x16xbf16> to vector<2x8x16xbf16>
    %24 = vector.extract_strided_slice %21 {offsets = [1, 0, 0, 0], sizes = [1, 2, 8, 16], strides = [1, 1, 1, 1]} : vector<3x2x8x16xbf16> to vector<1x2x8x16xbf16>
    %25 = vector.shape_cast %24 : vector<1x2x8x16xbf16> to vector<2x8x16xbf16>
    %26 = vector.extract_strided_slice %21 {offsets = [2, 0, 0, 0], sizes = [1, 2, 8, 16], strides = [1, 1, 1, 1]} : vector<3x2x8x16xbf16> to vector<1x2x8x16xbf16>
    %27 = vector.shape_cast %26 : vector<1x2x8x16xbf16> to vector<2x8x16xbf16>
    "tpu.trace_start"() <{level = 10 : i32, message = "xte,xse->xts"}> : () -> ()
    %cst_5 = arith.constant dense<0.000000e+00> : vector<2x8x8xf32>
    %28 = tpu.matmul %23, %25, %cst_5 {dimension_numbers = #tpu.dot_dimension_numbers<[2], [2], [1], [1], [0, 0, 0, 1, 1, 1], [0], [0]>} : vector<2x8x16xbf16>, vector<2x8x16xbf16>, vector<2x8x8xf32> -> vector<2x8x8xf32>
    "tpu.trace_stop"() : () -> ()
    %c0_6 = arith.constant 0 : index
    %c0_7 = arith.constant 0 : index
    %29 = vector.load %arg2[%c0_6, %c0_7] : memref<8x8xf32, #tpu.memory_space<vmem>>, vector<8x8xf32>
    %30 = vector.shape_cast %29 : vector<8x8xf32> to vector<1x8x8xf32>
    %31 = vector.broadcast %30 : vector<1x8x8xf32> to vector<2x8x8xf32>
    %32 = arith.addf %28, %31 : vector<2x8x8xf32>
    %cst_8 = arith.constant dense<0xFF800000> : vector<2x8xf32>
    %33 = vector.multi_reduction <maximumf>, %32, %cst_8 [2] : vector<2x8x8xf32> to vector<2x8xf32>
    %34 = vector.shape_cast %33 : vector<2x8xf32> to vector<2x8x1xf32>
    %35 = vector.broadcast %34 : vector<2x8x1xf32> to vector<2x8x8xf32>
    %36 = arith.subf %32, %35 : vector<2x8x8xf32>
    %37 = math.exp %36 : vector<2x8x8xf32>
    %cst_9 = arith.constant dense<0.000000e+00> : vector<2x8xf32>
    %38 = vector.multi_reduction <add>, %37, %cst_9 [2] : vector<2x8x8xf32> to vector<2x8xf32>
    %39 = vector.shape_cast %38 : vector<2x8xf32> to vector<2x8x1xf32>
    %40 = tpu.reciprocal %39 {approx = true} : vector<2x8x1xf32> -> vector<2x8x1xf32>
    %41 = arith.truncf %37 : vector<2x8x8xf32> to vector<2x8x8xbf16>
    "tpu.trace_start"() <{level = 10 : i32, message = "xts,xse->xte"}> : () -> ()
    %cst_10 = arith.constant dense<0.000000e+00> : vector<2x8x16xf32>
    %42 = tpu.matmul %41, %27, %cst_10 {dimension_numbers = #tpu.dot_dimension_numbers<[2], [1], [1], [2], [0, 0, 0, 1, 1, 2], [0], [0]>} : vector<2x8x8xbf16>, vector<2x8x16xbf16>, vector<2x8x16xf32> -> vector<2x8x16xf32>
    "tpu.trace_stop"() : () -> ()
    %43 = vector.broadcast %40 : vector<2x8x1xf32> to vector<2x8x16xf32>
    %44 = arith.mulf %42, %43 : vector<2x8x16xf32>
    %45 = arith.truncf %44 : vector<2x8x16xf32> to vector<2x8x16xbf16>
    %46 = vector.extract_strided_slice %45 {offsets = [0, 0, 0], sizes = [1, 8, 16], strides = [1, 1, 1]} : vector<2x8x16xbf16> to vector<1x8x16xbf16>
    %47 = vector.shape_cast %46 : vector<1x8x16xbf16> to vector<8x16xbf16>
    %48 = vector.extract_strided_slice %45 {offsets = [1, 0, 0], sizes = [1, 8, 16], strides = [1, 1, 1]} : vector<2x8x16xbf16> to vector<1x8x16xbf16>
    %49 = vector.shape_cast %48 : vector<1x8x16xbf16> to vector<8x16xbf16>
    %50 = tpu.concatenate %47, %49 in 1 : vector<8x16xbf16>, vector<8x16xbf16> -> vector<8x32xbf16>
    %c0_11 = arith.constant 0 : index
    %c0_12 = arith.constant 0 : index
    %51 = vector.load %arg5[%c0_11, %c0_12] : memref<32x32xbf16, #tpu.memory_space<vmem>>, vector<32x32xbf16>
    %cst_13 = arith.constant dense<0.000000e+00> : vector<8x32xf32>
    %52 = tpu.matmul %50, %51, %cst_13 {dimension_numbers = #tpu.dot_dimension_numbers<[1], [0], [0], [1], [0, 0, 1, 1], [], []>} : vector<8x32xbf16>, vector<32x32xbf16>, vector<8x32xf32> -> vector<8x32xf32>
    %c0_14 = arith.constant 0 : index
    %c0_15 = arith.constant 0 : index
    %53 = vector.load %arg6[%c0_14, %c0_15] : memref<1x32xf32, #tpu.memory_space<vmem>>, vector<1x32xf32>
    %54 = vector.broadcast %53 : vector<1x32xf32> to vector<8x32xf32>
    %55 = arith.addf %52, %54 : vector<8x32xf32>
    %56 = arith.addf %55, %0 : vector<8x32xf32>
    %cst_16 = arith.constant dense<0.000000e+00> : vector<8xf32>
    %57 = vector.multi_reduction <add>, %56, %cst_16 [1] : vector<8x32xf32> to vector<8xf32>
    %58 = vector.shape_cast %57 : vector<8xf32> to vector<8x1xf32>
    %cst_17 = arith.constant 3.200000e+01 : f32
    %59 = vector.broadcast %cst_17 : f32 to vector<8x1xf32>
    %60 = arith.divf %58, %59 : vector<8x1xf32>
    %61 = vector.broadcast %60 : vector<8x1xf32> to vector<8x32xf32>
    %62 = arith.subf %56, %61 : vector<8x32xf32>
    %63 = arith.mulf %62, %62 : vector<8x32xf32>
    %cst_18 = arith.constant dense<0.000000e+00> : vector<8xf32>
    %64 = vector.multi_reduction <add>, %63, %cst_18 [1] : vector<8x32xf32> to vector<8xf32>
    %65 = vector.shape_cast %64 : vector<8xf32> to vector<8x1xf32>
    %cst_19 = arith.constant 3.200000e+01 : f32
    %66 = vector.broadcast %cst_19 : f32 to vector<8x1xf32>
    %67 = arith.divf %65, %66 : vector<8x1xf32>
    %68 = vector.broadcast %60 : vector<8x1xf32> to vector<8x32xf32>
    %69 = arith.subf %56, %68 : vector<8x32xf32>
    %cst_20 = arith.constant 9.99999974E-6 : f32
    %70 = vector.broadcast %cst_20 : f32 to vector<8x1xf32>
    %71 = arith.addf %67, %70 : vector<8x1xf32>
    %72 = math.rsqrt %71 : vector<8x1xf32>
    %73 = vector.broadcast %72 : vector<8x1xf32> to vector<8x32xf32>
    %74 = arith.mulf %69, %73 : vector<8x32xf32>
    %c0_21 = arith.constant 0 : index
    %c0_22 = arith.constant 0 : index
    %75 = vector.load %arg7[%c0_21, %c0_22] : memref<1x32xf32, #tpu.memory_space<vmem>>, vector<1x32xf32>
    %76 = vector.broadcast %75 : vector<1x32xf32> to vector<8x32xf32>
    %77 = arith.mulf %74, %76 : vector<8x32xf32>
    %c0_23 = arith.constant 0 : index
    %c0_24 = arith.constant 0 : index
    %78 = vector.load %arg8[%c0_23, %c0_24] : memref<1x32xf32, #tpu.memory_space<vmem>>, vector<1x32xf32>
    %79 = vector.broadcast %78 : vector<1x32xf32> to vector<8x32xf32>
    %80 = arith.addf %77, %79 : vector<8x32xf32>
    %c0_25 = arith.constant 0 : index
    %c0_26 = arith.constant 0 : index
    %81 = vector.load %arg9[%c0_25, %c0_26] : memref<8x32xf32, #tpu.memory_space<vmem>>, vector<8x32xf32>
    tpu.vector_store %arg9[%c0_25, %c0_26], %80 {strides = array<i32>} : memref<8x32xf32, #tpu.memory_space<vmem>>, vector<8x32xf32>,
    return
  }
  func.func @transform_0(%arg0: i32) -> (i32, i32) {
    %c0_i32 = arith.constant 0 : i32
    %c0_i32_0 = arith.constant 0 : i32
    return %arg0, %c0_i32 : i32, i32
  }
  func.func @transform_1(%arg0: i32) -> (i32, i32) {
    %c0_i32 = arith.constant 0 : i32
    %c0_i32_0 = arith.constant 0 : i32
    %c0_i32_1 = arith.constant 0 : i32
    return %c0_i32, %c0_i32_0 : i32, i32
  }
  func.func @transform_2(%arg0: i32) -> (i32, i32) {
    %c0_i32 = arith.constant 0 : i32
    %c0_i32_0 = arith.constant 0 : i32
    %c0_i32_1 = arith.constant 0 : i32
    return %c0_i32, %c0_i32_0 : i32, i32
  }
  func.func @transform_3(%arg0: i32) -> (i32, i32) {
    %c0_i32 = arith.constant 0 : i32
    %c0_i32_0 = arith.constant 0 : i32
    %c0_i32_1 = arith.constant 0 : i32
    return %c0_i32, %c0_i32_0 : i32, i32
  }
  func.func @transform_4(%arg0: i32) -> (i32, i32) {
    %c0_i32 = arith.constant 0 : i32
    %c0_i32_0 = arith.constant 0 : i32
    %c0_i32_1 = arith.constant 0 : i32
    return %c0_i32, %c0_i32_0 : i32, i32
  }
  func.func @transform_5(%arg0: i32) -> (i32, i32) {
    %c0_i32 = arith.constant 0 : i32
    %c0_i32_0 = arith.constant 0 : i32
    %c0_i32_1 = arith.constant 0 : i32
    return %c0_i32, %c0_i32_0 : i32, i32
  }
  func.func @transform_6(%arg0: i32) -> (i32, i32) {
    %c0_i32 = arith.constant 0 : i32
    %c0_i32_0 = arith.constant 0 : i32
    %c0_i32_1 = arith.constant 0 : i32
    return %c0_i32, %c0_i32_0 : i32, i32
  }
  func.func @transform_7(%arg0: i32) -> (i32, i32) {
    %c0_i32 = arith.constant 0 : i32
    %c0_i32_0 = arith.constant 0 : i32
    %c0_i32_1 = arith.constant 0 : i32
    return %c0_i32, %c0_i32_0 : i32, i32
  }
  func.func @transform_8(%arg0: i32) -> (i32, i32) {
    %c0_i32 = arith.constant 0 : i32
    %c0_i32_0 = arith.constant 0 : i32
    return %arg0, %c0_i32 : i32, i32
  }
}

module attributes {stable_mosaic.version = 11 : i64} {
  func.func @decoder_layer_kernel(%arg0: i32, %arg1: memref<8x32xf32, #tpu.memory_space<vmem>>, %arg2: memref<8x8xf32, #tpu.memory_space<vmem>>, %arg3: memref<32x96xbf16, #tpu.memory_space<vmem>>, %arg4: memref<1x96xf32, #tpu.memory_space<vmem>>, %arg5: memref<32x32xbf16, #tpu.memory_space<vmem>>, %arg6: memref<1x32xf32, #tpu.memory_space<vmem>>, %arg7: memref<1x32xf32, #tpu.memory_space<vmem>>, %arg8: memref<1x32xf32, #tpu.memory_space<vmem>>, %arg9: memref<8x32xf32, #tpu.memory_space<vmem>>) attributes {dimension_semantics = [#tpu.dimension_semantics<parallel>], iteration_bounds = array<i64: 2>, scalar_prefetch = 0 : i64, scratch_operands = 0 : i64, tpu.core_type = #tpu.core_type<tc>, window_params = [{transform_indices = @transform_0, window_bounds = array<i64: 8, 32>}, {pipeline_mode = #tpu.pipeline_mode<synchronous>, transform_indices = @transform_1, window_bounds = array<i64: 8, 8>}, {pipeline_mode = #tpu.pipeline_mode<synchronous>, transform_indices = @transform_2, window_bounds = array<i64: 32, 96>}, {pipeline_mode = #tpu.pipeline_mode<synchronous>, transform_indices = @transform_3, window_bounds = array<i64: 1, 96>}, {pipeline_mode = #tpu.pipeline_mode<synchronous>, transform_indices = @transform_4, window_bounds = array<i64: 32, 32>}, {pipeline_mode = #tpu.pipeline_mode<synchronous>, transform_indices = @transform_5, window_bounds = array<i64: 1, 32>}, {pipeline_mode = #tpu.pipeline_mode<synchronous>, transform_indices = @transform_6, window_bounds = array<i64: 1, 32>}, {pipeline_mode = #tpu.pipeline_mode<synchronous>, transform_indices = @transform_7, window_bounds = array<i64: 1, 32>}, {transform_indices = @transform_8, window_bounds = array<i64: 8, 32>}]} {
    %c0 = arith.constant 0 : index
    %c0_0 = arith.constant 0 : index
    %0 = vector.load %arg1[%c0, %c0_0] : memref<8x32xf32, #tpu.memory_space<vmem>>, vector<8x32xf32>
    %1 = arith.truncf %0 : vector<8x32xf32> to vector<8x32xbf16>
    %c0_1 = arith.constant 0 : index
    %c0_2 = arith.constant 0 : index
    %2 = vector.load %arg3[%c0_1, %c0_2] : memref<32x96xbf16, #tpu.memory_space<vmem>>, vector<32x96xbf16>
    %cst = arith.constant dense<0.000000e+00> : vector<8x96xf32>
    %3 = tpu.matmul %1, %2, %cst {dimension_numbers = #tpu.dot_dimension_numbers<[1], [0], [0], [1], [0, 0, 1, 1], [], []>} : vector<8x32xbf16>, vector<32x96xbf16>, vector<8x96xf32> -> vector<8x96xf32>
    %c0_3 = arith.constant 0 : index
    %c0_4 = arith.constant 0 : index
    %4 = vector.load %arg4[%c0_3, %c0_4] : memref<1x96xf32, #tpu.memory_space<vmem>>, vector<1x96xf32>
    %5 = vector.broadcast %4 : vector<1x96xf32> to vector<8x96xf32>
    %6 = arith.addf %3, %5 : vector<8x96xf32>
    %7 = arith.truncf %6 : vector<8x96xf32> to vector<8x96xbf16>
    %8 = vector.extract_strided_slice %7 {offsets = [0, 0], sizes = [8, 16], strides = [1, 1]} : vector<8x96xbf16> to vector<8x16xbf16>
    %9 = vector.extract_strided_slice %7 {offsets = [0, 16], sizes = [8, 16], strides = [1, 1]} : vector<8x96xbf16> to vector<8x16xbf16>
    %10 = vector.extract_strided_slice %7 {offsets = [0, 32], sizes = [8, 16], strides = [1, 1]} : vector<8x96xbf16> to vector<8x16xbf16>
    %11 = vector.extract_strided_slice %7 {offsets = [0, 48], sizes = [8, 16], strides = [1, 1]} : vector<8x96xbf16> to vector<8x16xbf16>
    %12 = vector.extract_strided_slice %7 {offsets = [0, 64], sizes = [8, 16], strides = [1, 1]} : vector<8x96xbf16> to vector<8x16xbf16>
    %13 = vector.extract_strided_slice %7 {offsets = [0, 80], sizes = [8, 16], strides = [1, 1]} : vector<8x96xbf16> to vector<8x16xbf16>
    %14 = vector.shape_cast %8 : vector<8x16xbf16> to vector<1x8x16xbf16>
    %15 = vector.shape_cast %9 : vector<8x16xbf16> to vector<1x8x16xbf16>
    %16 = vector.shape_cast %10 : vector<8x16xbf16> to vector<1x8x16xbf16>
    %17 = vector.shape_cast %11 : vector<8x16xbf16> to vector<1x8x16xbf16>
    %18 = vector.shape_cast %12 : vector<8x16xbf16> to vector<1x8x16xbf16>
    %19 = vector.shape_cast %13 : vector<8x16xbf16> to vector<1x8x16xbf16>
    %20 = tpu.concatenate %14, %15, %16, %17, %18, %19 in 0 : vector<1x8x16xbf16>, vector<1x8x16xbf16>, vector<1x8x16xbf16>, vector<1x8x16xbf16>, vector<1x8x16xbf16>, vector<1x8x16xbf16> -> vector<6x8x16xbf16>
    %21 = vector.shape_cast %20 : vector<6x8x16xbf16> to vector<3x2x8x16xbf16>
    %22 = vector.extract_strided_slice %21 {offsets = [0, 0, 0, 0], sizes = [1, 2, 8, 16], strides = [1, 1, 1, 1]} : vector<3x2x8x16xbf16> to vector<1x2x8x16xbf16>
    %23 = vector.shape_cast %22 : vector<1x2x8x16xbf16> to vector<2x8x16xbf16>
    %24 = vector.extract_strided_slice %21 {offsets = [1, 0, 0, 0], sizes = [1, 2, 8, 16], strides = [1, 1, 1, 1]} : vector<3x2x8x16xbf16> to vector<1x2x8x16xbf16>
    %25 = vector.shape_cast %24 : vector<1x2x8x16xbf16> to vector<2x8x16xbf16>
    %26 = vector.extract_strided_slice %21 {offsets = [2, 0, 0, 0], sizes = [1, 2, 8, 16], strides = [1, 1, 1, 1]} : vector<3x2x8x16xbf16> to vector<1x2x8x16xbf16>
    %27 = vector.shape_cast %26 : vector<1x2x8x16xbf16> to vector<2x8x16xbf16>
    "tpu.trace_start"() <{level = 10 : i32, message = "xte,xse->xts"}> : () -> ()
    %cst_5 = arith.constant dense<0.000000e+00> : vector<2x8x8xf32>
    %28 = tpu.matmul %23, %25, %cst_5 {dimension_numbers = #tpu.dot_dimension_numbers<[2], [2], [1], [1], [0, 0, 0, 1, 1, 1], [0], [0]>} : vector<2x8x16xbf16>, vector<2x8x16xbf16>, vector<2x8x8xf32> -> vector<2x8x8xf32>
    "tpu.trace_stop"() : () -> ()
    %c0_6 = arith.constant 0 : index
    %c0_7 = arith.constant 0 : index
    %29 = vector.load %arg2[%c0_6, %c0_7] : memref<8x8xf32, #tpu.memory_space<vmem>>, vector<8x8xf32>
    %30 = vector.shape_cast %29 : vector<8x8xf32> to vector<1x8x8xf32>
    %31 = vector.broadcast %30 : vector<1x8x8xf32> to vector<2x8x8xf32>
    %32 = arith.addf %28, %31 : vector<2x8x8xf32>
    %cst_8 = arith.constant dense<0xFF800000> : vector<2x8xf32>
    %33 = vector.multi_reduction <maximumf>, %32, %cst_8 [2] : vector<2x8x8xf32> to vector<2x8xf32>
    %34 = vector.shape_cast %33 : vector<2x8xf32> to vector<2x8x1xf32>
    %35 = vector.broadcast %34 : vector<2x8x1xf32> to vector<2x8x8xf32>
    %36 = arith.subf %32, %35 : vector<2x8x8xf32>
    %37 = math.exp %36 : vector<2x8x8xf32>
    %cst_9 = arith.constant dense<0.000000e+00> : vector<2x8xf32>
    %38 = vector.multi_reduction <add>, %37, %cst_9 [2] : vector<2x8x8xf32> to vector<2x8xf32>
    %39 = vector.shape_cast %38 : vector<2x8xf32> to vector<2x8x1xf32>
    %40 = tpu.reciprocal %39 {approx = true} : vector<2x8x1xf32> -> vector<2x8x1xf32>
    %41 = arith.truncf %37 : vector<2x8x8xf32> to vector<2x8x8xbf16>
    "tpu.trace_start"() <{level = 10 : i32, message = "xts,xse->xte"}> : () -> ()
    %cst_10 = arith.constant dense<0.000000e+00> : vector<2x8x16xf32>
    %42 = tpu.matmul %41, %27, %cst_10 {dimension_numbers = #tpu.dot_dimension_numbers<[2], [1], [1], [2], [0, 0, 0, 1, 1, 2], [0], [0]>} : vector<2x8x8xbf16>, vector<2x8x16xbf16>, vector<2x8x16xf32> -> vector<2x8x16xf32>
    "tpu.trace_stop"() : () -> ()
    %43 = vector.broadcast %40 : vector<2x8x1xf32> to vector<2x8x16xf32>
    %44 = arith.mulf %42, %43 : vector<2x8x16xf32>
    %45 = arith.truncf %44 : vector<2x8x16xf32> to vector<2x8x16xbf16>
    %46 = vector.extract_strided_slice %45 {offsets = [0, 0, 0], sizes = [1, 8, 16], strides = [1, 1, 1]} : vector<2x8x16xbf16> to vector<1x8x16xbf16>
    %47 = vector.shape_cast %46 : vector<1x8x16xbf16> to vector<8x16xbf16>
    %48 = vector.extract_strided_slice %45 {offsets = [1, 0, 0], sizes = [1, 8, 16], strides = [1, 1, 1]} : vector<2x8x16xbf16> to vector<1x8x16xbf16>
    %49 = vector.shape_cast %48 : vector<1x8x16xbf16> to vector<8x16xbf16>
    %50 = tpu.concatenate %47, %49 in 1 : vector<8x16xbf16>, vector<8x16xbf16> -> vector<8x32xbf16>
    %c0_11 = arith.constant 0 : index
    %c0_12 = arith.constant 0 : index
    %51 = vector.load %arg5[%c0_11, %c0_12] : memref<32x32xbf16, #tpu.memory_space<vmem>>, vector<32x32xbf16>
    %cst_13 = arith.constant dense<0.000000e+00> : vector<8x32xf32>
    %52 = tpu.matmul %50, %51, %cst_13 {dimension_numbers = #tpu.dot_dimension_numbers<[1], [0], [0], [1], [0, 0, 1, 1], [], []>} : vector<8x32xbf16>, vector<32x32xbf16>, vector<8x32xf32> -> vector<8x32xf32>
    %c0_14 = arith.constant 0 : index
    %c0_15 = arith.constant 0 : index
    %53 = vector.load %arg6[%c0_14, %c0_15] : memref<1x32xf32, #tpu.memory_space<vmem>>, vector<1x32xf32>
    %54 = vector.broadcast %53 : vector<1x32xf32> to vector<8x32xf32>
    %55 = arith.addf %52, %54 : vector<8x32xf32>
    %56 = arith.addf %55, %0 : vector<8x32xf32>
    %cst_16 = arith.constant dense<0.000000e+00> : vector<8xf32>
    %57 = vector.multi_reduction <add>, %56, %cst_16 [1] : vector<8x32xf32> to vector<8xf32>
    %58 = vector.shape_cast %57 : vector<8xf32> to vector<8x1xf32>
    %cst_17 = arith.constant 3.200000e+01 : f32
    %59 = vector.broadcast %cst_17 : f32 to vector<8x1xf32>
    %60 = arith.divf %58, %59 : vector<8x1xf32>
    %61 = vector.broadcast %60 : vector<8x1xf32> to vector<8x32xf32>
    %62 = arith.subf %56, %61 : vector<8x32xf32>
    %63 = arith.mulf %62, %62 : vector<8x32xf32>
    %cst_18 = arith.constant dense<0.000000e+00> : vector<8xf32>
    %64 = vector.multi_reduction <add>, %63, %cst_18 [1] : vector<8x32xf32> to vector<8xf32>
    %65 = vector.shape_cast %64 : vector<8xf32> to vector<8x1xf32>
    %cst_19 = arith.constant 3.200000e+01 : f32
    %66 = vector.broadcast %cst_19 : f32 to vector<8x1xf32>
    %67 = arith.divf %65, %66 : vector<8x1xf32>
    %68 = vector.broadcast %60 : vector<8x1xf32> to vector<8x32xf32>
    %69 = arith.subf %56, %68 : vector<8x32xf32>
    %cst_20 = arith.constant 9.99999974E-6 : f32
    %70 = vector.broadcast %cst_20 : f32 to vector<8x1xf32>
    %71 = arith.addf %67, %70 : vector<8x1xf32>
    %72 = math.rsqrt %71 : vector<8x1xf32>
    %73 = vector.broadcast %72 : vector<8x1xf32> to vector<8x32xf32>
    %74 = arith.mulf %69, %73 : vector<8x32xf32>
    %c0_21 = arith.constant 0 : index
    %c0_22 = arith.constant 0 : index
    %75 = vector.load %arg7[%c0_21, %c0_22] : memref<1x32xf32, #tpu.memory_space<vmem>>, vector<1x32xf32>
    %76 = vector.broadcast %75 : vector<1x32xf32> to vector<8x32xf32>
    %77 = arith.mulf %74, %76 : vector<8x32xf32>
    %c0_23 = arith.constant 0 : index
    %c0_24 = arith.constant 0 : index
    %78 = vector.load %arg8[%c0_23, %c0_24] : memref<1x32xf32, #tpu.memory_space<vmem>>, vector<1x32xf32>
    %79 = vector.broadcast %78 : vector<1x32xf32> to vector<8x32xf32>
    %80 = arith.addf %77, %79 : vector<8x32xf32>
    %c0_25 = arith.constant 0 : index
    %c0_26 = arith.constant 0 : index
    %81 = vector.load %arg9[%c0_25, %c0_26] : memref<8x32xf32, #tpu.memory_space<vmem>>, vector<8x32xf32>
    tpu.vector_store %arg9[%c0_25, %c0_26], %80 {strides = array<i32>} : memref<8x32xf32, #tpu.memory_space<vmem>>, vector<8x32xf32>,
    return
  }
  func.func @transform_0(%arg0: i32) -> (i32, i32) {
    %c0_i32 = arith.constant 0 : i32
    %c0_i32_0 = arith.constant 0 : i32
    return %arg0, %c0_i32 : i32, i32
  }
  func.func @transform_1(%arg0: i32) -> (i32, i32) {
    %c0_i32 = arith.constant 0 : i32
    %c0_i32_0 = arith.constant 0 : i32
    %c0_i32_1 = arith.constant 0 : i32
    return %c0_i32, %c0_i32_0 : i32, i32
  }
  func.func @transform_2(%arg0: i32) -> (i32, i32) {
    %c0_i32 = arith.constant 0 : i32
    %c0_i32_0 = arith.constant 0 : i32
    %c0_i32_1 = arith.constant 0 : i32
    return %c0_i32, %c0_i32_0 : i32, i32
  }
  func.func @transform_3(%arg0: i32) -> (i32, i32) {
    %c0_i32 = arith.constant 0 : i32
    %c0_i32_0 = arith.constant 0 : i32
    %c0_i32_1 = arith.constant 0 : i32
    return %c0_i32, %c0_i32_0 : i32, i32
  }
  func.func @transform_4(%arg0: i32) -> (i32, i32) {
    %c0_i32 = arith.constant 0 : i32
    %c0_i32_0 = arith.constant 0 : i32
    %c0_i32_1 = arith.constant 0 : i32
    return %c0_i32, %c0_i32_0 : i32, i32
  }
  func.func @transform_5(%arg0: i32) -> (i32, i32) {
    %c0_i32 = arith.constant 0 : i32
    %c0_i32_0 = arith.constant 0 : i32
    %c0_i32_1 = arith.constant 0 : i32
    return %c0_i32, %c0_i32_0 : i32, i32
  }
  func.func @transform_6(%arg0: i32) -> (i32, i32) {
    %c0_i32 = arith.constant 0 : i32
    %c0_i32_0 = arith.constant 0 : i32
    %c0_i32_1 = arith.constant 0 : i32
    return %c0_i32, %c0_i32_0 : i32, i32
  }
  func.func @transform_7(%arg0: i32) -> (i32, i32) {
    %c0_i32 = arith.constant 0 : i32
    %c0_i32_0 = arith.constant 0 : i32
    %c0_i32_1 = arith.constant 0 : i32
    return %c0_i32, %c0_i32_0 : i32, i32
  }
  func.func @transform_8(%arg0: i32) -> (i32, i32) {
    %c0_i32 = arith.constant 0 : i32
    %c0_i32_0 = arith.constant 0 : i32
    return %arg0, %c0_i32 : i32, i32
  }
}

</mosaic_0001>

<llo_original>
// kernel: tpu_custom_call.1
$region0: #{tpu_custom_call.1}
  #allocation0 [shape = 'u32[]', space=smem, size = 0x4, offset = 0x4, fixed_abs, tag = 'smem constant byte address 0x4 - core index']
  #allocation1 [shape = 'u32[144,128]{1,0:T(1,128)}', space=vmem, size = 0x12000, scoped, tag = 'internal scratch']
  %s0 = inlined_call_operand.hbm [shape: f32[16,32], index: 0, kind: input, shape index: {}]
  %s1 = inlined_call_operand.hbm [shape: f32[8,8], index: 1, kind: input, shape index: {}]
  %s2 = inlined_call_operand.hbm [shape: bf16[32,96], index: 2, kind: input, shape index: {}]
  %s3 = inlined_call_operand.vmem [shape: f32[1,96], index: 3, kind: input, shape index: {}]
  %s4 = inlined_call_operand.hbm [shape: bf16[32,32], index: 4, kind: input, shape index: {}]
  %s5 = inlined_call_operand.vmem [shape: f32[1,32], index: 5, kind: input, shape index: {}]
  %s6 = inlined_call_operand.vmem [shape: f32[1,32], index: 6, kind: input, shape index: {}]
  %s7 = inlined_call_operand.vmem [shape: f32[1,32], index: 7, kind: input, shape index: {}]
  %s8 = inlined_call_operand.hbm [shape: f32[16,32], index: 8, kind: output, shape index: {}]
  %s9 = sld [smem:[#allocation0]]
  $region81: #{tpu_custom_call.1} parent=0
    _
  %s11 = ssub.s32 1, %s9
  %s12 = scalar_select 0, %s11, %s9
  $region1: #{tpu_custom_call.1} parent=0
    #allocation2 [shape = 'u8[8192]{0}', space=vmem, size = 0x2000, scoped, tag = 'input window, operand 0']
    #allocation3 [shape = 's32[2]{0}', space=sflag, size = 0x8, scoped, tag = 'scoped memory for tpu_custom_call.1']
    #allocation4 [shape = 's32[2]{0}', space=sflag, size = 0x8, scoped, tag = 'scoped memory for tpu_custom_call.1']
    #allocation5 [shape = 'u8[4096]{0}', space=vmem, size = 0x1000, scoped, tag = 'input window, operand 1, single buffered']
    #allocation6 [shape = 's32[1]{0}', space=sflag, size = 0x4, scoped, tag = 'scoped memory for tpu_custom_call.1']
    #allocation7 [shape = 'u8[8192]{0}', space=vmem, size = 0x2000, scoped, tag = 'input window, operand 2, single buffered']
    #allocation8 [shape = 'u8[8192]{0}', space=vmem, size = 0x2000, scoped, tag = 'input window, operand 4, single buffered']
    #allocation9 [shape = 's32[1]{0}', space=sflag, size = 0x4, scoped, tag = 'scoped memory for tpu_custom_call.1']
    #allocation10 [shape = 'u8[8192]{0}', space=vmem, size = 0x2000, scoped, tag = 'output window, operand 0']
    %13 = vsyncpa [#allocation3], 0
    %s14 = scalar_lea.sflag [#allocation3], 1
    %15 = vsyncpa %s14, 0
    %16 = vsyncpa [#allocation6], 0
    %17 = vsyncpa [#allocation9], 0
    %18 = vsyncpa [#allocation4], 0
    %s19 = scalar_lea.sflag [#allocation4], 1
    %20 = vsyncpa %s19, 0
    loop: start=0, step=1, limit=4
    $region2: #{tpu_custom_call.1} parent=1 // loop_pre_header
      _
    $region3: #{tpu_custom_call.1} parent=1 // loop_header
      %s22 = sphi 0, %s26
      %p23 = scmp.ge.s32.totalorder %s22, 4
      %s32 = sphi 0, %s34
      %s35 = sphi 0, %s32
      %s36 = sphi 0, %s35
      %s52 = sphi 0, %s36
      %s56 = sphi 0, %s56
      %s58 = sphi 0, %s56
      %s59 = sphi 0, %s58
      %s73 = sphi 0, %s59
      %s77 = sphi 0, %s77
      %s79 = sphi 0, %s77
      %s80 = sphi 0, %s79
      %s94 = sphi 0, %s80
      %s98 = sphi 0, %s98
      %s100 = sphi 0, %s98
      %s101 = sphi 0, %s100
      %s115 = sphi 0, %s101
      %s119 = sphi 0, %s119
      %s121 = sphi 0, %s119
      %s122 = sphi 0, %s121
      %s136 = sphi 0, %s122
      %s140 = sphi 0, %s140
      %s142 = sphi 0, %s140
      %s143 = sphi 0, %s142
      %s157 = sphi 0, %s143
      %s161 = sphi 0, %s161
      %s163 = sphi 0, %s161
      %s164 = sphi 0, %s163
      %s178 = sphi 0, %s164
      %s182 = sphi 0, %s182
      %s184 = sphi 0, %s182
      %s185 = sphi 0, %s184
      %s199 = sphi 0, %s185
      %s205 = sphi 0, %s207
      %s208 = sphi 0, %s205
      %s209 = sphi 0, %s208
      %s225 = sphi 0, %s209
    $region4: #{tpu_custom_call.1} parent=1 // loop_header_branch
      %25 = sbr.rel (%p23) target = $region8
    $region5: #{tpu_custom_call.1} parent=1 // loop_body
      %s27 = ssub.s32 %s22, 1
      %s28 = ssub.s32 %s22, 2
      %s29 = sadd.s32 %s22, 1
      %s30 = ssub.s32 %s22, %s29
      %p31 = scmp.eq.s32.totalorder %s30, 0
      %s33 = sadd.s32 %s32, 1
      %s34 = scalar_select %p31, %s32, %s33
      %p37 = pneg %p31
      %p38 = scmp.eq.s32.totalorder %s22, 1
      %p39 = por %p37, %p38
      %p40 = scmp.ne.s32.totalorder %s32, %s35
      %p41 = scmp.eq.s32.totalorder %s22, 0
      %p42 = por %p40, %p41
      %p43 = scmp.ne.s32.totalorder %s32, %s35
      %p44 = scmp.eq.s32.totalorder %s27, 1
      %p45 = por %p43, %p44
      %p46 = scmp.ne.s32.totalorder %s35, %s36
      %p47 = scmp.eq.s32.totalorder %s27, 0
      %p48 = por %p46, %p47
      %p49 = scmp.ne.s32.totalorder %s35, %s36
      %p50 = scmp.eq.s32.totalorder %s28, 1
      %p51 = por %p49, %p50
      %p53 = scmp.ne.s32.totalorder %s36, %s52
      %p54 = scmp.eq.s32.totalorder %s28, 0
      %p55 = por %p53, %p54
      %s57 = sadd.s32 %s56, 1
      %p60 = scmp.eq.s32.totalorder %s22, 1
      %p61 = scmp.ne.s32.totalorder %s56, %s58
      %p62 = scmp.eq.s32.totalorder %s22, 0
      %p63 = por %p61, %p62
      %p64 = scmp.ne.s32.totalorder %s56, %s58
      %p65 = scmp.eq.s32.totalorder %s27, 1
      %p66 = por %p64, %p65
      %p67 = scmp.ne.s32.totalorder %s58, %s59
      %p68 = scmp.eq.s32.totalorder %s27, 0
      %p69 = por %p67, %p68
      %p70 = scmp.ne.s32.totalorder %s58, %s59
      %p71 = scmp.eq.s32.totalorder %s28, 1
      %p72 = por %p70, %p71
      %p74 = scmp.ne.s32.totalorder %s59, %s73
      %p75 = scmp.eq.s32.totalorder %s28, 0
      %p76 = por %p74, %p75
      %s78 = sadd.s32 %s77, 1
      %p81 = scmp.eq.s32.totalorder %s22, 1
      %p82 = scmp.ne.s32.totalorder %s77, %s79
      %p83 = scmp.eq.s32.totalorder %s22, 0
      %p84 = por %p82, %p83
      %p85 = scmp.ne.s32.totalorder %s77, %s79
      %p86 = scmp.eq.s32.totalorder %s27, 1
      %p87 = por %p85, %p86
      %p88 = scmp.ne.s32.totalorder %s79, %s80
      %p89 = scmp.eq.s32.totalorder %s27, 0
      %p90 = por %p88, %p89
      %p91 = scmp.ne.s32.totalorder %s79, %s80
      %p92 = scmp.eq.s32.totalorder %s28, 1
      %p93 = por %p91, %p92
      %p95 = scmp.ne.s32.totalorder %s80, %s94
      %p96 = scmp.eq.s32.totalorder %s28, 0
      %p97 = por %p95, %p96
      %s99 = sadd.s32 %s98, 1
      %p102 = scmp.eq.s32.totalorder %s22, 1
      %p103 = scmp.ne.s32.totalorder %s98, %s100
      %p104 = scmp.eq.s32.totalorder %s22, 0
      %p105 = por %p103, %p104
      %p106 = scmp.ne.s32.totalorder %s98, %s100
      %p107 = scmp.eq.s32.totalorder %s27, 1
      %p108 = por %p106, %p107
      %p109 = scmp.ne.s32.totalorder %s100, %s101
      %p110 = scmp.eq.s32.totalorder %s27, 0
      %p111 = por %p109, %p110
      %p112 = scmp.ne.s32.totalorder %s100, %s101
      %p113 = scmp.eq.s32.totalorder %s28, 1
      %p114 = por %p112, %p113
      %p116 = scmp.ne.s32.totalorder %s101, %s115
      %p117 = scmp.eq.s32.totalorder %s28, 0
      %p118 = por %p116, %p117
      %s120 = sadd.s32 %s119, 1
      %p123 = scmp.eq.s32.totalorder %s22, 1
      %p124 = scmp.ne.s32.totalorder %s119, %s121
      %p125 = scmp.eq.s32.totalorder %s22, 0
      %p126 = por %p124, %p125
      %p127 = scmp.ne.s32.totalorder %s119, %s121
      %p128 = scmp.eq.s32.totalorder %s27, 1
      %p129 = por %p127, %p128
      %p130 = scmp.ne.s32.totalorder %s121, %s122
      %p131 = scmp.eq.s32.totalorder %s27, 0
      %p132 = por %p130, %p131
      %p133 = scmp.ne.s32.totalorder %s121, %s122
      %p134 = scmp.eq.s32.totalorder %s28, 1
      %p135 = por %p133, %p134
      %p137 = scmp.ne.s32.totalorder %s122, %s136
      %p138 = scmp.eq.s32.totalorder %s28, 0
      %p139 = por %p137, %p138
      %s141 = sadd.s32 %s140, 1
      %p144 = scmp.eq.s32.totalorder %s22, 1
      %p145 = scmp.ne.s32.totalorder %s140, %s142
      %p146 = scmp.eq.s32.totalorder %s22, 0
      %p147 = por %p145, %p146
      %p148 = scmp.ne.s32.totalorder %s140, %s142
      %p149 = scmp.eq.s32.totalorder %s27, 1
      %p150 = por %p148, %p149
      %p151 = scmp.ne.s32.totalorder %s142, %s143
      %p152 = scmp.eq.s32.totalorder %s27, 0
      %p153 = por %p151, %p152
      %p154 = scmp.ne.s32.totalorder %s142, %s143
      %p155 = scmp.eq.s32.totalorder %s28, 1
      %p156 = por %p154, %p155
      %p158 = scmp.ne.s32.totalorder %s143, %s157
      %p159 = scmp.eq.s32.totalorder %s28, 0
      %p160 = por %p158, %p159
      %s162 = sadd.s32 %s161, 1
      %p165 = scmp.eq.s32.totalorder %s22, 1
      %p166 = scmp.ne.s32.totalorder %s161, %s163
      %p167 = scmp.eq.s32.totalorder %s22, 0
      %p168 = por %p166, %p167
      %p169 = scmp.ne.s32.totalorder %s161, %s163
      %p170 = scmp.eq.s32.totalorder %s27, 1
      %p171 = por %p169, %p170
      %p172 = scmp.ne.s32.totalorder %s163, %s164
      %p173 = scmp.eq.s32.totalorder %s27, 0
      %p174 = por %p172, %p173
      %p175 = scmp.ne.s32.totalorder %s163, %s164
      %p176 = scmp.eq.s32.totalorder %s28, 1
      %p177 = por %p175, %p176
      %p179 = scmp.ne.s32.totalorder %s164, %s178
      %p180 = scmp.eq.s32.totalorder %s28, 0
      %p181 = por %p179, %p180
      %s183 = sadd.s32 %s182, 1
      %p186 = scmp.eq.s32.totalorder %s22, 1
      %p187 = scmp.ne.s32.totalorder %s182, %s184
      %p188 = scmp.eq.s32.totalorder %s22, 0
      %p189 = por %p187, %p188
      %p190 = scmp.ne.s32.totalorder %s182, %s184
      %p191 = scmp.eq.s32.totalorder %s27, 1
      %p192 = por %p190, %p191
      %p193 = scmp.ne.s32.totalorder %s184, %s185
      %p194 = scmp.eq.s32.totalorder %s27, 0
      %p195 = por %p193, %p194
      %p196 = scmp.ne.s32.totalorder %s184, %s185
      %p197 = scmp.eq.s32.totalorder %s28, 1
      %p198 = por %p196, %p197
      %p200 = scmp.ne.s32.totalorder %s185, %s199
      %p201 = scmp.eq.s32.totalorder %s28, 0
      %p202 = por %p200, %p201
      %s203 = ssub.s32 %s22, %s29
      %p204 = scmp.eq.s32.totalorder %s203, 0
      %s206 = sadd.s32 %s205, 1
      %s207 = scalar_select %p204, %s205, %s206
      %p210 = pneg %p204
      %p211 = scmp.eq.s32.totalorder %s22, 1
      %p212 = por %p210, %p211
      %p213 = scmp.ne.s32.totalorder %s205, %s208
      %p214 = scmp.eq.s32.totalorder %s22, 0
      %p215 = por %p213, %p214
      %p216 = scmp.ne.s32.totalorder %s205, %s208
      %p217 = scmp.eq.s32.totalorder %s27, 1
      %p218 = por %p216, %p217
      %p219 = scmp.ne.s32.totalorder %s208, %s209
      %p220 = scmp.eq.s32.totalorder %s27, 0
      %p221 = por %p219, %p220
      %p222 = scmp.ne.s32.totalorder %s208, %s209
      %p223 = scmp.eq.s32.totalorder %s28, 1
      %p224 = por %p222, %p223
      %p226 = scmp.ne.s32.totalorder %s209, %s225
      %p227 = scmp.eq.s32.totalorder %s28, 0
      %p228 = por %p226, %p227
      %p229 = scmp.le.s32.totalorder 1, %s22
      %p230 = scmp.lt.s32.totalorder %s22, 3
      %p231 = pnand %p229, %p230
      %p232 = pneg %p231
      // Predicated region
      $region9: #{tpu_custom_call.1} parent=5 // pred_check
        _
      $region10: #{tpu_custom_call.1} parent=5 // pred_check_branch
        %234 = sbr.rel (%p231) target = $region12
      $region11: #{tpu_custom_call.1} parent=5 // pred_region
        %s235 = ssub.s32 %s22, 1
        // Predicated region
        $region13: #{tpu_custom_call.1} parent=11 // pred_check
          %p236 = pneg %p69
        $region14: #{tpu_custom_call.1} parent=11 // pred_check_branch
          %238 = sbr.rel (%p236) target = $region16
        $region15: #{tpu_custom_call.1} parent=11 // pred_region
          %s240 = ssub.s32 128, 128
          %241 = vsyncadd [#allocation6], %s240
          %s243 = sshll.u32 [#allocation5], 4
          %s244 = int_to_ptr.vmem [resolvable:$true] %s243
          %246 = dma.hbm_to_vmem [thread:$0]  %s1, 128, %s244, [#allocation6]
        $region16: #{tpu_custom_call.1} parent=11 // pred_fallthru
          _
        // Predicated region
        $region17: #{tpu_custom_call.1} parent=11 // pred_check
          %p247 = pneg %p90
        $region18: #{tpu_custom_call.1} parent=11 // pred_check_branch
          %249 = sbr.rel (%p247) target = $region20
        $region19: #{tpu_custom_call.1} parent=11 // pred_region
          %s251 = ssub.s32 256, 256
          %252 = vsyncadd [#allocation6], %s251
          %s253 = sshll.u32 [#allocation7], 4
          %s254 = int_to_ptr.vmem [resolvable:$true] %s253
          %259 = dma.hbm_to_vmem [thread:$0]  %s2, 256, %s254, [#allocation6], 64, 64, 4
        $region20: #{tpu_custom_call.1} parent=11 // pred_fallthru
          _
        // Predicated region
        $region21: #{tpu_custom_call.1} parent=11 // pred_check
          %p260 = pneg %p111
        $region22: #{tpu_custom_call.1} parent=11 // pred_check_branch
          %262 = sbr.rel (%p260) target = $region24
        $region23: #{tpu_custom_call.1} parent=11 // pred_region
          _
        $region24: #{tpu_custom_call.1} parent=11 // pred_fallthru
          _
        // Predicated region
        $region25: #{tpu_custom_call.1} parent=11 // pred_check
          %p263 = pneg %p132
        $region26: #{tpu_custom_call.1} parent=11 // pred_check_branch
          %265 = sbr.rel (%p263) target = $region28
        $region27: #{tpu_custom_call.1} parent=11 // pred_region
          %s267 = ssub.s32 256, 256
          %268 = vsyncadd [#allocation9], %s267
          %s269 = sshll.u32 [#allocation8], 4
          %s270 = int_to_ptr.vmem [resolvable:$true] %s269
          %275 = dma.hbm_to_vmem [thread:$0]  %s4, 256, %s270, [#allocation9], 64, 64, 4
        $region28: #{tpu_custom_call.1} parent=11 // pred_fallthru
          _
        // Predicated region
        $region29: #{tpu_custom_call.1} parent=11 // pred_check
          %p276 = pneg %p153
        $region30: #{tpu_custom_call.1} parent=11 // pred_check_branch
          %278 = sbr.rel (%p276) target = $region32
        $region31: #{tpu_custom_call.1} parent=11 // pred_region
          _
        $region32: #{tpu_custom_call.1} parent=11 // pred_fallthru
          _
        // Predicated region
        $region33: #{tpu_custom_call.1} parent=11 // pred_check
          %p279 = pneg %p174
        $region34: #{tpu_custom_call.1} parent=11 // pred_check_branch
          %281 = sbr.rel (%p279) target = $region36
        $region35: #{tpu_custom_call.1} parent=11 // pred_region
          _
        $region36: #{tpu_custom_call.1} parent=11 // pred_fallthru
          _
        // Predicated region
        $region37: #{tpu_custom_call.1} parent=11 // pred_check
          %p282 = pneg %p195
        $region38: #{tpu_custom_call.1} parent=11 // pred_check_branch
          %284 = sbr.rel (%p282) target = $region40
        $region39: #{tpu_custom_call.1} parent=11 // pred_region
          _
        $region40: #{tpu_custom_call.1} parent=11 // pred_fallthru
          _
      $region12: #{tpu_custom_call.1} parent=5 // pred_fallthru
        _
      %p285 = scmp.lt.s32.totalorder %s22, 2
      // Predicated region
      $region41: #{tpu_custom_call.1} parent=5 // pred_check
        %p286 = pneg %p285
      $region42: #{tpu_custom_call.1} parent=5 // pred_check_branch
        %288 = sbr.rel (%p286) target = $region44
      $region43: #{tpu_custom_call.1} parent=5 // pred_region
        // Predicated region
        $region45: #{tpu_custom_call.1} parent=43 // pred_check
          %p289 = pneg %p42
        $region46: #{tpu_custom_call.1} parent=43 // pred_check_branch
          %291 = sbr.rel (%p289) target = $region48
        $region47: #{tpu_custom_call.1} parent=43 // pred_region
          %s292 = sand.u32 %s32, 1
          %s293 = scalar_lea.sflag [#allocation3], %s292
          %s294 = sand.u32 %s32, 1
          %s295 = smul.addr %s294, 8
          %s296 = scalar_lea.vmem [#allocation2], %s295
          %s298 = ssub.s32 128, 128
          %299 = vsyncadd %s293, %s298
          %s300 = smul.addr %s22, 128
          %s301 = scalar_lea.hbm %s0, %s300
          %s303 = sshll.u32 %s296, 4
          %s304 = int_to_ptr.vmem [resolvable:$true] %s303
          %306 = dma.hbm_to_vmem [thread:$0]  %s301, 128, %s304, %s293
        $region48: #{tpu_custom_call.1} parent=43 // pred_fallthru
          _
      $region44: #{tpu_custom_call.1} parent=5 // pred_fallthru
        _
      %p307 = scmp.le.s32.totalorder 1, %s22
      %p308 = scmp.lt.s32.totalorder %s22, 3
      %p309 = pnand %p307, %p308
      %p310 = pneg %p309
      // Predicated region
      $region49: #{tpu_custom_call.1} parent=5 // pred_check
        _
      $region50: #{tpu_custom_call.1} parent=5 // pred_check_branch
        %312 = sbr.rel (%p309) target = $region52
      $region51: #{tpu_custom_call.1} parent=5 // pred_region
        %s313 = ssub.s32 %s22, 1
        %s314 = sand.u32 %s35, 1
        %s315 = scalar_lea.sflag [#allocation3], %s314
        %s316 = sand.u32 %s35, 1
        %s317 = smul.addr %s316, 8
        %s318 = scalar_lea.vmem [#allocation2], %s317
        // Predicated region
        $region53: #{tpu_custom_call.1} parent=51 // pred_check
          %p319 = pneg %p48
        $region54: #{tpu_custom_call.1} parent=51 // pred_check_branch
          %321 = sbr.rel (%p319) target = $region56
        $region55: #{tpu_custom_call.1} parent=51 // pred_region
          %322 = dma.done %s315, 128
        $region56: #{tpu_custom_call.1} parent=51 // pred_fallthru
          _
        // Predicated region
        $region57: #{tpu_custom_call.1} parent=51 // pred_check
          %p323 = pneg %p69
        $region58: #{tpu_custom_call.1} parent=51 // pred_check_branch
          %325 = sbr.rel (%p323) target = $region60
        $region59: #{tpu_custom_call.1} parent=51 // pred_region
          %326 = dma.done [#allocation6], 128
        $region60: #{tpu_custom_call.1} parent=51 // pred_fallthru
          _
        // Predicated region
        $region61: #{tpu_custom_call.1} parent=51 // pred_check
          %p327 = pneg %p90
        $region62: #{tpu_custom_call.1} parent=51 // pred_check_branch
          %329 = sbr.rel (%p327) target = $region64
        $region63: #{tpu_custom_call.1} parent=51 // pred_region
          %330 = dma.done [#allocation6], 256
        $region64: #{tpu_custom_call.1} parent=51 // pred_fallthru
          _
        // Predicated region
        $region65: #{tpu_custom_call.1} parent=51 // pred_check
          %p331 = pneg %p132
        $region66: #{tpu_custom_call.1} parent=51 // pred_check_branch
          %333 = sbr.rel (%p331) target = $region68
        $region67: #{tpu_custom_call.1} parent=51 // pred_region
          %334 = dma.done [#allocation9], 256
        $region68: #{tpu_custom_call.1} parent=51 // pred_fallthru
          _
        %s335 = sand.u32 %s35, 1
        %s336 = scalar_lea.sflag [#allocation3], %s335
        %s337 = sand.u32 %s35, 1
        %s338 = smul.addr %s337, 8
        %s339 = scalar_lea.vmem [#allocation2], %s338
        %p340 = pneg %p48
        %p341 = pneg %p45
        %p342 = pneg %p69
        %p343 = pneg %p66
        %p344 = pneg %p90
        %p345 = pneg %p87
        %p346 = pneg %p111
        %p347 = pneg %p108
        %p348 = pneg %p132
        %p349 = pneg %p129
        %p350 = pneg %p153
        %p351 = pneg %p150
        %p352 = pneg %p174
        %p353 = pneg %p171
        %p354 = pneg %p195
        %p355 = pneg %p192
        %p356 = pneg %p221
        %p357 = pneg %p218
        %s358 = sand.u32 %s208, 1
        %s359 = scalar_lea.sflag [#allocation4], %s358
        %s360 = sand.u32 %s208, 1
        %s361 = smul.addr %s360, 8
        %s362 = scalar_lea.vmem [#allocation10], %s361
        %v364 = vld [vmem:[%s318] sm:$0xff]
        %v365 = vpack.c.bf16 %v364, %v364
        %v366 = vld [vmem:[#allocation7] sm:$0xf]
        %v367 = vld [vmem:[#allocation7 + $0x4] sm:$0xf]
        %v368 = vld [vmem:[#allocation7 + $0x8] sm:$0xf]
        %v369 = vld [vmem:[#allocation7 + $0xc] sm:$0xf]
        %v370 = vld [vmem:[%s3] sm:$0x1]
        %v372 = vlaneseq
        %v373 = vshrl.u32 %v372, 7
        %v374 = vsub.s32 0, %v373
        %v375 = vrot.slane %v370, %v374
        %v381 = vunpack.c.l.b16 %v366
        %v382 = vunpack.c.l.b16 %v367
        %v383 = vunpack.c.l.b16 %v368
        %v384 = vunpack.c.l.b16 %v369
        %v385 = vpack.c.b16 %v382, %v381
        %v386 = vpack.c.b16 %v384, %v383
        %vm389 = vcmask 261120
        %v391 = vsel %vm389, %v365, 0
        %393 = vmatprep.subr.bf16.mxu0 0
        %394 = vmatpush1.bf16.msra.mxu0 %v385
        %395 = vmatprep.subr.bf16.mxu0 0
        %396 = vmatpush1.bf16.msra.mxu0 %v386
        %397 = vmatprep.subr.bf16.mxu0 0
        %398 = vmatpush1.bf16.msra.mxu0 0
        %399 = vmatprep.subr.bf16.mxu0 0
        %400 = vmatpush1.bf16.msra.mxu0 0
        %401 = vmatprep.subr.bf16.mxu0 0
        %402 = vmatpush1.bf16.msra.mxu0 0
        %403 = vmatprep.subr.bf16.mxu0 0
        %404 = vmatpush1.bf16.msra.mxu0 0
        %405 = vmatprep.subr.bf16.mxu0 0
        %406 = vmatpush1.bf16.msra.mxu0 0
        %407 = vmatprep.subr.bf16.mxu0 0
        %408 = vmatpush1.bf16.msra.mxu0 0
        %409 = vmatprep.subr.bf16.mxu0 0
        %410 = vmatpush1.bf16.msra.mxu0 0
        %411 = vmatprep.subr.bf16.mxu0 0
        %412 = vmatpush1.bf16.msra.mxu0 0
        %413 = vmatprep.subr.bf16.mxu0 0
        %414 = vmatpush1.bf16.msra.mxu0 0
        %415 = vmatprep.subr.bf16.mxu0 0
        %416 = vmatpush1.bf16.msra.mxu0 0
        %417 = vmatprep.subr.bf16.mxu0 0
        %418 = vmatpush1.bf16.msra.mxu0 0
        %419 = vmatprep.subr.bf16.mxu0 0
        %420 = vmatpush1.bf16.msra.mxu0 0
        %421 = vmatprep.subr.bf16.mxu0 0
        %422 = vmatpush1.bf16.msra.mxu0 0
        %423 = vmatprep.subr.bf16.mxu0 0
        %424 = vmatpush1.bf16.msra.mxu0 0
        %425 = vmatprep.mubr.bf16.mxu0 0
        %426 = vmatmul.mubr.bf16.gmra.mrb[0].mxu0 %v391
        %v427 = vpop.f32.mrb[0].mxu0
        %v428 = vadd.f32 %v375, %v427
        %v429 = vpop.f32.mrb[0].mxu0
        %v430 = vpop.f32.mrb[0].mxu0
        %v431 = vpop.f32.mrb[0].mxu0
        %432 = vdwg.mxu0
        %v433 = vpack.c.bf16 %v428, %v428
        %435 = vrot.lane.b32.xlu0 %v433, 112
        %v436 = vpop.permute.xlu0 %435
        %437 = vrot.lane.b32.xlu0 %v433, 96
        %v438 = vpop.permute.xlu0 %437
        %439 = vrot.lane.b32.xlu0 %v433, 80
        %v440 = vpop.permute.xlu0 %439
        %441 = vrot.lane.b32.xlu0 %v433, 64
        %v442 = vpop.permute.xlu0 %441
        %443 = vrot.lane.b32.xlu0 %v433, 48
        %v444 = vpop.permute.xlu0 %443
        %v445 = vld [vmem:[#allocation5] sm:$0xff]
        %vm446 = vcmask 130048
        %v448 = vsel %vm446, %v433, 0
        %v451 = vsel %vm446, %v438, 0
        %453 = vmatprep.subr.bf16.mxu0 0
        %454 = vmatpush1.bf16.xpose.msra.mxu0 %v451
        %455 = vmatprep.subr.bf16.mxu0 0
        %456 = vmatpush1.bf16.xpose.msra.mxu0 0
        %457 = vmatprep.subr.bf16.mxu0 0
        %458 = vmatpush1.bf16.xpose.msra.mxu0 0
        %459 = vmatprep.subr.bf16.mxu0 0
        %460 = vmatpush1.bf16.xpose.msra.mxu0 0
        %461 = vmatprep.subr.bf16.mxu0 0
        %462 = vmatpush1.bf16.xpose.msra.mxu0 0
        %463 = vmatprep.subr.bf16.mxu0 0
        %464 = vmatpush1.bf16.xpose.msra.mxu0 0
        %465 = vmatprep.subr.bf16.mxu0 0
        %466 = vmatpush1.bf16.xpose.msra.mxu0 0
        %467 = vmatprep.subr.bf16.mxu0 0
        %468 = vmatpush1.bf16.xpose.msra.mxu0 0
        %469 = vmatprep.subr.bf16.mxu0 0
        %470 = vmatpush1.bf16.xpose.msra.mxu0 0
        %471 = vmatprep.subr.bf16.mxu0 0
        %472 = vmatpush1.bf16.xpose.msra.mxu0 0
        %473 = vmatprep.subr.bf16.mxu0 0
        %474 = vmatpush1.bf16.xpose.msra.mxu0 0
        %475 = vmatprep.subr.bf16.mxu0 0
        %476 = vmatpush1.bf16.xpose.msra.mxu0 0
        %477 = vmatprep.subr.bf16.mxu0 0
        %478 = vmatpush1.bf16.xpose.msra.mxu0 0
        %479 = vmatprep.subr.bf16.mxu0 0
        %480 = vmatpush1.bf16.xpose.msra.mxu0 0
        %481 = vmatprep.subr.bf16.mxu0 0
        %482 = vmatpush1.bf16.xpose.msra.mxu0 0
        %483 = vmatprep.subr.bf16.mxu0 0
        %484 = vmatpush1.bf16.xpose.msra.mxu0 0
        %485 = vmatprep.mubr.bf16.mxu0 0
        %486 = vmatmul.mubr.bf16.gmra.mrb[0].mxu0 %v448
        %v487 = vpop.f32.mrb[0].mxu0
        %v488 = vadd.f32 %v445, %v487
        %v489 = vpop.f32.mrb[0].mxu0
        %v490 = vpop.f32.mrb[0].mxu0
        %v491 = vpop.f32.mrb[0].mxu0
        %492 = vdwg.mxu0
        %v494 = vsel %vm446, %v436, 0
        %v497 = vsel %vm446, %v440, 0
        %499 = vmatprep.subr.bf16.mxu0 0
        %500 = vmatpush1.bf16.xpose.msra.mxu0 %v497
        %501 = vmatprep.subr.bf16.mxu0 0
        %502 = vmatpush1.bf16.xpose.msra.mxu0 0
        %503 = vmatprep.subr.bf16.mxu0 0
        %504 = vmatpush1.bf16.xpose.msra.mxu0 0
        %505 = vmatprep.subr.bf16.mxu0 0
        %506 = vmatpush1.bf16.xpose.msra.mxu0 0
        %507 = vmatprep.subr.bf16.mxu0 0
        %508 = vmatpush1.bf16.xpose.msra.mxu0 0
        %509 = vmatprep.subr.bf16.mxu0 0
        %510 = vmatpush1.bf16.xpose.msra.mxu0 0
        %511 = vmatprep.subr.bf16.mxu0 0
        %512 = vmatpush1.bf16.xpose.msra.mxu0 0
        %513 = vmatprep.subr.bf16.mxu0 0
        %514 = vmatpush1.bf16.xpose.msra.mxu0 0
        %515 = vmatprep.subr.bf16.mxu0 0
        %516 = vmatpush1.bf16.xpose.msra.mxu0 0
        %517 = vmatprep.subr.bf16.mxu0 0
        %518 = vmatpush1.bf16.xpose.msra.mxu0 0
        %519 = vmatprep.subr.bf16.mxu0 0
        %520 = vmatpush1.bf16.xpose.msra.mxu0 0
        %521 = vmatprep.subr.bf16.mxu0 0
        %522 = vmatpush1.bf16.xpose.msra.mxu0 0
        %523 = vmatprep.subr.bf16.mxu0 0
        %524 = vmatpush1.bf16.xpose.msra.mxu0 0
        %525 = vmatprep.subr.bf16.mxu0 0
        %526 = vmatpush1.bf16.xpose.msra.mxu0 0
        %527 = vmatprep.subr.bf16.mxu0 0
        %528 = vmatpush1.bf16.xpose.msra.mxu0 0
        %529 = vmatprep.subr.bf16.mxu0 0
        %530 = vmatpush1.bf16.xpose.msra.mxu0 0
        %531 = vmatprep.mubr.bf16.mxu0 0
        %532 = vmatmul.mubr.bf16.gmra.mrb[0].mxu0 %v494
        %v533 = vpop.f32.mrb[0].mxu0
        %v534 = vadd.f32 %v445, %v533
        %v535 = vpop.f32.mrb[0].mxu0
        %v536 = vpop.f32.mrb[0].mxu0
        %v537 = vpop.f32.mrb[0].mxu0
        %538 = vdwg.mxu0
        %vm539 = vcmask 64512
        %v540 = vsel %vm539, %v488, -inf
        %541 = vmax.xlane.f32.xlu0 %v540
        %v542 = vpop.xlane.xlu0 %541
        %v543 = vsel %vm539, %v534, -inf
        %544 = vmax.xlane.f32.xlu0 %v543
        %v545 = vpop.xlane.xlu0 %544
        %v546 = vsub.f32 %v488, %v542
        %v547 = vsub.f32 %v534, %v545
        %v548 = vmul.f32 %v546, 1.442695
        %v549 = vpow.pop %v548
        %v550 = vmul.f32 %v547, 1.442695
        %v551 = vpow.pop %v550
        %v552 = vsel %vm539, %v549, 0.0
        %553 = vadd.xlane.f32.xlu0 %v552
        %v554 = vpop.xlane.xlu0 %553
        %v555 = vsel %vm539, %v551, 0.0
        %556 = vadd.xlane.f32.xlu0 %v555
        %v557 = vpop.xlane.xlu0 %556
        %v558 = vrcp.pop %v554
        %v559 = vrcp.pop %v557
        %v560 = vpack.c.bf16 %v549, %v549
        %v561 = vpack.c.bf16 %v551, %v551
        %v563 = vsel %vm539, %v560, 0
        %vm565 = vcmask 1043456
        %v567 = vsel %vm565, %v442, 0
        %569 = vmatprep.subr.bf16.mxu0 0
        %570 = vmatpush1.bf16.msra.mxu0 %v567
        %571 = vmatprep.subr.bf16.mxu0 0
        %572 = vmatpush1.bf16.msra.mxu0 0
        %573 = vmatprep.subr.bf16.mxu0 0
        %574 = vmatpush1.bf16.msra.mxu0 0
        %575 = vmatprep.subr.bf16.mxu0 0
        %576 = vmatpush1.bf16.msra.mxu0 0
        %577 = vmatprep.subr.bf16.mxu0 0
        %578 = vmatpush1.bf16.msra.mxu0 0
        %579 = vmatprep.subr.bf16.mxu0 0
        %580 = vmatpush1.bf16.msra.mxu0 0
        %581 = vmatprep.subr.bf16.mxu0 0
        %582 = vmatpush1.bf16.msra.mxu0 0
        %583 = vmatprep.subr.bf16.mxu0 0
        %584 = vmatpush1.bf16.msra.mxu0 0
        %585 = vmatprep.subr.bf16.mxu0 0
        %586 = vmatpush1.bf16.msra.mxu0 0
        %587 = vmatprep.subr.bf16.mxu0 0
        %588 = vmatpush1.bf16.msra.mxu0 0
        %589 = vmatprep.subr.bf16.mxu0 0
        %590 = vmatpush1.bf16.msra.mxu0 0
        %591 = vmatprep.subr.bf16.mxu0 0
        %592 = vmatpush1.bf16.msra.mxu0 0
        %593 = vmatprep.subr.bf16.mxu0 0
        %594 = vmatpush1.bf16.msra.mxu0 0
        %595 = vmatprep.subr.bf16.mxu0 0
        %596 = vmatpush1.bf16.msra.mxu0 0
        %597 = vmatprep.subr.bf16.mxu0 0
        %598 = vmatpush1.bf16.msra.mxu0 0
        %599 = vmatprep.subr.bf16.mxu0 0
        %600 = vmatpush1.bf16.msra.mxu0 0
        %601 = vmatprep.mubr.bf16.mxu0 0
        %602 = vmatmul.mubr.bf16.gmra.mrb[0].mxu0 %v563
        %v603 = vpop.f32.mrb[0].mxu0
        %v604 = vadd.f32 0.0, %v603
        %v605 = vpop.f32.mrb[0].mxu0
        %v606 = vpop.f32.mrb[0].mxu0
        %v607 = vpop.f32.mrb[0].mxu0
        %608 = vdwg.mxu0
        %v610 = vsel %vm539, %v561, 0
        %v613 = vsel %vm565, %v444, 0
        %615 = vmatprep.subr.bf16.mxu0 0
        %616 = vmatpush1.bf16.msra.mxu0 %v613
        %617 = vmatprep.subr.bf16.mxu0 0
        %618 = vmatpush1.bf16.msra.mxu0 0
        %619 = vmatprep.subr.bf16.mxu0 0
        %620 = vmatpush1.bf16.msra.mxu0 0
        %621 = vmatprep.subr.bf16.mxu0 0
        %622 = vmatpush1.bf16.msra.mxu0 0
        %623 = vmatprep.subr.bf16.mxu0 0
        %624 = vmatpush1.bf16.msra.mxu0 0
        %625 = vmatprep.subr.bf16.mxu0 0
        %626 = vmatpush1.bf16.msra.mxu0 0
        %627 = vmatprep.subr.bf16.mxu0 0
        %628 = vmatpush1.bf16.msra.mxu0 0
        %629 = vmatprep.subr.bf16.mxu0 0
        %630 = vmatpush1.bf16.msra.mxu0 0
        %631 = vmatprep.subr.bf16.mxu0 0
        %632 = vmatpush1.bf16.msra.mxu0 0
        %633 = vmatprep.subr.bf16.mxu0 0
        %634 = vmatpush1.bf16.msra.mxu0 0
        %635 = vmatprep.subr.bf16.mxu0 0
        %636 = vmatpush1.bf16.msra.mxu0 0
        %637 = vmatprep.subr.bf16.mxu0 0
        %638 = vmatpush1.bf16.msra.mxu0 0
        %639 = vmatprep.subr.bf16.mxu0 0
        %640 = vmatpush1.bf16.msra.mxu0 0
        %641 = vmatprep.subr.bf16.mxu0 0
        %642 = vmatpush1.bf16.msra.mxu0 0
        %643 = vmatprep.subr.bf16.mxu0 0
        %644 = vmatpush1.bf16.msra.mxu0 0
        %645 = vmatprep.subr.bf16.mxu0 0
        %646 = vmatpush1.bf16.msra.mxu0 0
        %647 = vmatprep.mubr.bf16.mxu0 0
        %648 = vmatmul.mubr.bf16.gmra.mrb[0].mxu0 %v610
        %v649 = vpop.f32.mrb[0].mxu0
        %v650 = vadd.f32 0.0, %v649
        %v651 = vpop.f32.mrb[0].mxu0
        %v652 = vpop.f32.mrb[0].mxu0
        %v653 = vpop.f32.mrb[0].mxu0
        %654 = vdwg.mxu0
        %v655 = vmul.f32 %v604, %v558
        %v656 = vmul.f32 %v650, %v559
        %v657 = vpack.c.bf16 %v655, %v655
        %v658 = vpack.c.bf16 %v656, %v656
        %660 = vrot.lane.b32.xlu0 %v658, 16
        %v661 = vpop.permute.xlu0 %660
        %v664 = vsel %vm446, %v657, %v661
        %v665 = vld [vmem:[#allocation8] sm:$0xf]
        %v666 = vld [vmem:[#allocation8 + $0x4] sm:$0xf]
        %v667 = vld [vmem:[#allocation8 + $0x8] sm:$0xf]
        %v668 = vld [vmem:[#allocation8 + $0xc] sm:$0xf]
        %v669 = vld [vmem:[%s5] sm:$0x1]
        %v671 = vlaneseq
        %v672 = vshrl.u32 %v671, 7
        %v673 = vsub.s32 0, %v672
        %v674 = vrot.slane %v669, %v673
        %v680 = vunpack.c.l.b16 %v665
        %v681 = vunpack.c.l.b16 %v666
        %v682 = vunpack.c.l.b16 %v667
        %v683 = vunpack.c.l.b16 %v668
        %v684 = vpack.c.b16 %v681, %v680
        %v685 = vpack.c.b16 %v683, %v682
        %v688 = vsel %vm389, %v664, 0
        %690 = vmatprep.subr.bf16.mxu0 0
        %691 = vmatpush1.bf16.msra.mxu0 %v684
        %692 = vmatprep.subr.bf16.mxu0 0
        %693 = vmatpush1.bf16.msra.mxu0 %v685
        %694 = vmatprep.subr.bf16.mxu0 0
        %695 = vmatpush1.bf16.msra.mxu0 0
        %696 = vmatprep.subr.bf16.mxu0 0
        %697 = vmatpush1.bf16.msra.mxu0 0
        %698 = vmatprep.subr.bf16.mxu0 0
        %699 = vmatpush1.bf16.msra.mxu0 0
        %700 = vmatprep.subr.bf16.mxu0 0
        %701 = vmatpush1.bf16.msra.mxu0 0
        %702 = vmatprep.subr.bf16.mxu0 0
        %703 = vmatpush1.bf16.msra.mxu0 0
        %704 = vmatprep.subr.bf16.mxu0 0
        %705 = vmatpush1.bf16.msra.mxu0 0
        %706 = vmatprep.subr.bf16.mxu0 0
        %707 = vmatpush1.bf16.msra.mxu0 0
        %708 = vmatprep.subr.bf16.mxu0 0
        %709 = vmatpush1.bf16.msra.mxu0 0
        %710 = vmatprep.subr.bf16.mxu0 0
        %711 = vmatpush1.bf16.msra.mxu0 0
        %712 = vmatprep.subr.bf16.mxu0 0
        %713 = vmatpush1.bf16.msra.mxu0 0
        %714 = vmatprep.subr.bf16.mxu0 0
        %715 = vmatpush1.bf16.msra.mxu0 0
        %716 = vmatprep.subr.bf16.mxu0 0
        %717 = vmatpush1.bf16.msra.mxu0 0
        %718 = vmatprep.subr.bf16.mxu0 0
        %719 = vmatpush1.bf16.msra.mxu0 0
        %720 = vmatprep.subr.bf16.mxu0 0
        %721 = vmatpush1.bf16.msra.mxu0 0
        %722 = vmatprep.mubr.bf16.mxu0 0
        %723 = vmatmul.mubr.bf16.gmra.mrb[0].mxu0 %v688
        %v724 = vpop.f32.mrb[0].mxu0
        %v725 = vadd.f32 %v674, %v724
        %v726 = vpop.f32.mrb[0].mxu0
        %v727 = vpop.f32.mrb[0].mxu0
        %v728 = vpop.f32.mrb[0].mxu0
        %729 = vdwg.mxu0
        %v730 = vadd.f32 %v725, %v364
        %v731 = vsel %vm389, %v730, 0.0
        %732 = vadd.xlane.f32.xlu0 %v731
        %v733 = vpop.xlane.xlu0 %732
        %v734 = vrcp.pop 32.0
        %v735 = vmul.f32 %v733, %v734
        %v736 = vsub.f32 %v730, %v735
        %v737 = vmul.f32 %v736, %v736
        %v738 = vsel %vm389, %v737, 0.0
        %739 = vadd.xlane.f32.xlu0 %v738
        %v740 = vpop.xlane.xlu0 %739
        %v741 = vmul.f32 %v740, %v734
        %v742 = vadd.f32 %v741, 1e-05
        %v743 = vrsqrt.pop %v742
        %v744 = vmul.f32 %v736, %v743
        %v745 = vld [vmem:[%s6] sm:$0x1]
        %v747 = vlaneseq
        %v748 = vshrl.u32 %v747, 7
        %v749 = vsub.s32 0, %v748
        %v750 = vrot.slane %v745, %v749
        %v752 = vmul.f32 %v744, %v750
        %v753 = vld [vmem:[%s7] sm:$0x1]
        %v755 = vlaneseq
        %v756 = vshrl.u32 %v755, 7
        %v757 = vsub.s32 0, %v756
        %v758 = vrot.slane %v753, %v757
        %v760 = vadd.f32 %v752, %v758
        %761 = vst.msk [vmem:[%s362] sm:$0xff] %vm389, %v760
        %s762 = sand.u32 %s208, 1
        %s763 = scalar_lea.sflag [#allocation4], %s762
        %s764 = sand.u32 %s208, 1
        %s765 = smul.addr %s764, 8
        %s766 = scalar_lea.vmem [#allocation10], %s765
        // Predicated region
        $region69: #{tpu_custom_call.1} parent=51 // pred_check
          %p767 = pneg %p218
        $region70: #{tpu_custom_call.1} parent=51 // pred_check_branch
          %769 = sbr.rel (%p767) target = $region72
        $region71: #{tpu_custom_call.1} parent=51 // pred_region
          %s771 = ssub.s32 128, 128
          %772 = vsyncadd %s763, %s771
          %s773 = smul.addr %s27, 128
          %s774 = scalar_lea.hbm %s8, %s773
          %s776 = sshll.u32 %s766, 4
          %s777 = int_to_ptr.vmem [resolvable:$true] %s776
          %779 = dma.vmem_to_hbm [thread:$0]  %s777, 128, %s774, %s763
        $region72: #{tpu_custom_call.1} parent=51 // pred_fallthru
          _
      $region52: #{tpu_custom_call.1} parent=5 // pred_fallthru
        _
      %p780 = scmp.le.s32.totalorder 2, %s22
      // Predicated region
      $region73: #{tpu_custom_call.1} parent=5 // pred_check
        %p781 = pneg %p780
      $region74: #{tpu_custom_call.1} parent=5 // pred_check_branch
        %783 = sbr.rel (%p781) target = $region76
      $region75: #{tpu_custom_call.1} parent=5 // pred_region
        %s784 = ssub.s32 %s22, 2
        // Predicated region
        $region77: #{tpu_custom_call.1} parent=75 // pred_check
          %p785 = pneg %p224
        $region78: #{tpu_custom_call.1} parent=75 // pred_check_branch
          %787 = sbr.rel (%p785) target = $region80
        $region79: #{tpu_custom_call.1} parent=75 // pred_region
          %s788 = sand.u32 %s209, 1
          %s789 = scalar_lea.sflag [#allocation4], %s788
          %s790 = sand.u32 %s209, 1
          %s791 = smul.addr %s790, 8
          %s792 = scalar_lea.vmem [#allocation10], %s791
          %793 = dma.done %s789, 128
        $region80: #{tpu_custom_call.1} parent=75 // pred_fallthru
          _
      $region76: #{tpu_custom_call.1} parent=5 // pred_fallthru
        _
    $region6: #{tpu_custom_call.1} parent=1 // loop_footer
      %s26 = sadd.s32 1, %s22
    $region7: #{tpu_custom_call.1} parent=1 // loop_footer_branch
      %21 = sbr.rel target = $region3
    $region8: #{tpu_custom_call.1} parent=1 // loop_exit
      _
    %794 = vsyncpa [#allocation3], 1
    %s795 = scalar_lea.sflag [#allocation3], 1
    %796 = vsyncpa %s795, 1
    %797 = vsyncpa [#allocation6], 1
    %798 = vsyncpa [#allocation9], 1
    %799 = vsyncpa [#allocation4], 1
    %s800 = scalar_lea.sflag [#allocation4], 1
    %801 = vsyncpa %s800, 1

// kernel: tpu_custom_call.1
$region0: #{tpu_custom_call.1}
  #allocation0 [shape = 'u32[]', space=smem, size = 0x4, offset = 0x4, fixed_abs, tag = 'smem constant byte address 0x4 - core index']
  #allocation1 [shape = 'u32[144,128]{1,0:T(1,128)}', space=vmem, size = 0x12000, scoped, tag = 'internal scratch']
  %s0 = inlined_call_operand.hbm [shape: f32[16,32], index: 0, kind: input, shape index: {}]
  %s1 = inlined_call_operand.hbm [shape: f32[8,8], index: 1, kind: input, shape index: {}]
  %s2 = inlined_call_operand.hbm [shape: bf16[32,96], index: 2, kind: input, shape index: {}]
  %s3 = inlined_call_operand.vmem [shape: f32[1,96], index: 3, kind: input, shape index: {}]
  %s4 = inlined_call_operand.hbm [shape: bf16[32,32], index: 4, kind: input, shape index: {}]
  %s5 = inlined_call_operand.vmem [shape: f32[1,32], index: 5, kind: input, shape index: {}]
  %s6 = inlined_call_operand.vmem [shape: f32[1,32], index: 6, kind: input, shape index: {}]
  %s7 = inlined_call_operand.vmem [shape: f32[1,32], index: 7, kind: input, shape index: {}]
  %s8 = inlined_call_operand.hbm [shape: f32[16,32], index: 8, kind: output, shape index: {}]
  %s9 = sld [smem:[#allocation0]]
  $region81: #{tpu_custom_call.1} parent=0
    _
  %s11 = ssub.s32 1, %s9
  %s12 = scalar_select 0, %s11, %s9
  $region1: #{tpu_custom_call.1} parent=0
    #allocation2 [shape = 'u8[8192]{0}', space=vmem, size = 0x2000, scoped, tag = 'input window, operand 0']
    #allocation3 [shape = 's32[2]{0}', space=sflag, size = 0x8, scoped, tag = 'scoped memory for tpu_custom_call.1']
    #allocation4 [shape = 's32[2]{0}', space=sflag, size = 0x8, scoped, tag = 'scoped memory for tpu_custom_call.1']
    #allocation5 [shape = 'u8[4096]{0}', space=vmem, size = 0x1000, scoped, tag = 'input window, operand 1, single buffered']
    #allocation6 [shape = 's32[1]{0}', space=sflag, size = 0x4, scoped, tag = 'scoped memory for tpu_custom_call.1']
    #allocation7 [shape = 'u8[8192]{0}', space=vmem, size = 0x2000, scoped, tag = 'input window, operand 2, single buffered']
    #allocation8 [shape = 'u8[8192]{0}', space=vmem, size = 0x2000, scoped, tag = 'input window, operand 4, single buffered']
    #allocation9 [shape = 's32[1]{0}', space=sflag, size = 0x4, scoped, tag = 'scoped memory for tpu_custom_call.1']
    #allocation10 [shape = 'u8[8192]{0}', space=vmem, size = 0x2000, scoped, tag = 'output window, operand 0']
    %13 = vsyncpa [#allocation3], 0
    %s14 = scalar_lea.sflag [#allocation3], 1
    %15 = vsyncpa %s14, 0
    %16 = vsyncpa [#allocation6], 0
    %17 = vsyncpa [#allocation9], 0
    %18 = vsyncpa [#allocation4], 0
    %s19 = scalar_lea.sflag [#allocation4], 1
    %20 = vsyncpa %s19, 0
    loop: start=0, step=1, limit=4
    $region2: #{tpu_custom_call.1} parent=1 // loop_pre_header
      _
    $region3: #{tpu_custom_call.1} parent=1 // loop_header
      %s22 = sphi 0, %s26
      %p23 = scmp.ge.s32.totalorder %s22, 4
      %s32 = sphi 0, %s34
      %s35 = sphi 0, %s32
      %s36 = sphi 0, %s35
      %s52 = sphi 0, %s36
      %s56 = sphi 0, %s56
      %s58 = sphi 0, %s56
      %s59 = sphi 0, %s58
      %s73 = sphi 0, %s59
      %s77 = sphi 0, %s77
      %s79 = sphi 0, %s77
      %s80 = sphi 0, %s79
      %s94 = sphi 0, %s80
      %s98 = sphi 0, %s98
      %s100 = sphi 0, %s98
      %s101 = sphi 0, %s100
      %s115 = sphi 0, %s101
      %s119 = sphi 0, %s119
      %s121 = sphi 0, %s119
      %s122 = sphi 0, %s121
      %s136 = sphi 0, %s122
      %s140 = sphi 0, %s140
      %s142 = sphi 0, %s140
      %s143 = sphi 0, %s142
      %s157 = sphi 0, %s143
      %s161 = sphi 0, %s161
      %s163 = sphi 0, %s161
      %s164 = sphi 0, %s163
      %s178 = sphi 0, %s164
      %s182 = sphi 0, %s182
      %s184 = sphi 0, %s182
      %s185 = sphi 0, %s184
      %s199 = sphi 0, %s185
      %s205 = sphi 0, %s207
      %s208 = sphi 0, %s205
      %s209 = sphi 0, %s208
      %s225 = sphi 0, %s209
    $region4: #{tpu_custom_call.1} parent=1 // loop_header_branch
      %25 = sbr.rel (%p23) target = $region8
    $region5: #{tpu_custom_call.1} parent=1 // loop_body
      %s27 = ssub.s32 %s22, 1
      %s28 = ssub.s32 %s22, 2
      %s29 = sadd.s32 %s22, 1
      %s30 = ssub.s32 %s22, %s29
      %p31 = scmp.eq.s32.totalorder %s30, 0
      %s33 = sadd.s32 %s32, 1
      %s34 = scalar_select %p31, %s32, %s33
      %p37 = pneg %p31
      %p38 = scmp.eq.s32.totalorder %s22, 1
      %p39 = por %p37, %p38
      %p40 = scmp.ne.s32.totalorder %s32, %s35
      %p41 = scmp.eq.s32.totalorder %s22, 0
      %p42 = por %p40, %p41
      %p43 = scmp.ne.s32.totalorder %s32, %s35
      %p44 = scmp.eq.s32.totalorder %s27, 1
      %p45 = por %p43, %p44
      %p46 = scmp.ne.s32.totalorder %s35, %s36
      %p47 = scmp.eq.s32.totalorder %s27, 0
      %p48 = por %p46, %p47
      %p49 = scmp.ne.s32.totalorder %s35, %s36
      %p50 = scmp.eq.s32.totalorder %s28, 1
      %p51 = por %p49, %p50
      %p53 = scmp.ne.s32.totalorder %s36, %s52
      %p54 = scmp.eq.s32.totalorder %s28, 0
      %p55 = por %p53, %p54
      %s57 = sadd.s32 %s56, 1
      %p60 = scmp.eq.s32.totalorder %s22, 1
      %p61 = scmp.ne.s32.totalorder %s56, %s58
      %p62 = scmp.eq.s32.totalorder %s22, 0
      %p63 = por %p61, %p62
      %p64 = scmp.ne.s32.totalorder %s56, %s58
      %p65 = scmp.eq.s32.totalorder %s27, 1
      %p66 = por %p64, %p65
      %p67 = scmp.ne.s32.totalorder %s58, %s59
      %p68 = scmp.eq.s32.totalorder %s27, 0
      %p69 = por %p67, %p68
      %p70 = scmp.ne.s32.totalorder %s58, %s59
      %p71 = scmp.eq.s32.totalorder %s28, 1
      %p72 = por %p70, %p71
      %p74 = scmp.ne.s32.totalorder %s59, %s73
      %p75 = scmp.eq.s32.totalorder %s28, 0
      %p76 = por %p74, %p75
      %s78 = sadd.s32 %s77, 1
      %p81 = scmp.eq.s32.totalorder %s22, 1
      %p82 = scmp.ne.s32.totalorder %s77, %s79
      %p83 = scmp.eq.s32.totalorder %s22, 0
      %p84 = por %p82, %p83
      %p85 = scmp.ne.s32.totalorder %s77, %s79
      %p86 = scmp.eq.s32.totalorder %s27, 1
      %p87 = por %p85, %p86
      %p88 = scmp.ne.s32.totalorder %s79, %s80
      %p89 = scmp.eq.s32.totalorder %s27, 0
      %p90 = por %p88, %p89
      %p91 = scmp.ne.s32.totalorder %s79, %s80
      %p92 = scmp.eq.s32.totalorder %s28, 1
      %p93 = por %p91, %p92
      %p95 = scmp.ne.s32.totalorder %s80, %s94
      %p96 = scmp.eq.s32.totalorder %s28, 0
      %p97 = por %p95, %p96
      %s99 = sadd.s32 %s98, 1
      %p102 = scmp.eq.s32.totalorder %s22, 1
      %p103 = scmp.ne.s32.totalorder %s98, %s100
      %p104 = scmp.eq.s32.totalorder %s22, 0
      %p105 = por %p103, %p104
      %p106 = scmp.ne.s32.totalorder %s98, %s100
      %p107 = scmp.eq.s32.totalorder %s27, 1
      %p108 = por %p106, %p107
      %p109 = scmp.ne.s32.totalorder %s100, %s101
      %p110 = scmp.eq.s32.totalorder %s27, 0
      %p111 = por %p109, %p110
      %p112 = scmp.ne.s32.totalorder %s100, %s101
      %p113 = scmp.eq.s32.totalorder %s28, 1
      %p114 = por %p112, %p113
      %p116 = scmp.ne.s32.totalorder %s101, %s115
      %p117 = scmp.eq.s32.totalorder %s28, 0
      %p118 = por %p116, %p117
      %s120 = sadd.s32 %s119, 1
      %p123 = scmp.eq.s32.totalorder %s22, 1
      %p124 = scmp.ne.s32.totalorder %s119, %s121
      %p125 = scmp.eq.s32.totalorder %s22, 0
      %p126 = por %p124, %p125
      %p127 = scmp.ne.s32.totalorder %s119, %s121
      %p128 = scmp.eq.s32.totalorder %s27, 1
      %p129 = por %p127, %p128
      %p130 = scmp.ne.s32.totalorder %s121, %s122
      %p131 = scmp.eq.s32.totalorder %s27, 0
      %p132 = por %p130, %p131
      %p133 = scmp.ne.s32.totalorder %s121, %s122
      %p134 = scmp.eq.s32.totalorder %s28, 1
      %p135 = por %p133, %p134
      %p137 = scmp.ne.s32.totalorder %s122, %s136
      %p138 = scmp.eq.s32.totalorder %s28, 0
      %p139 = por %p137, %p138
      %s141 = sadd.s32 %s140, 1
      %p144 = scmp.eq.s32.totalorder %s22, 1
      %p145 = scmp.ne.s32.totalorder %s140, %s142
      %p146 = scmp.eq.s32.totalorder %s22, 0
      %p147 = por %p145, %p146
      %p148 = scmp.ne.s32.totalorder %s140, %s142
      %p149 = scmp.eq.s32.totalorder %s27, 1
      %p150 = por %p148, %p149
      %p151 = scmp.ne.s32.totalorder %s142, %s143
      %p152 = scmp.eq.s32.totalorder %s27, 0
      %p153 = por %p151, %p152
      %p154 = scmp.ne.s32.totalorder %s142, %s143
      %p155 = scmp.eq.s32.totalorder %s28, 1
      %p156 = por %p154, %p155
      %p158 = scmp.ne.s32.totalorder %s143, %s157
      %p159 = scmp.eq.s32.totalorder %s28, 0
      %p160 = por %p158, %p159
      %s162 = sadd.s32 %s161, 1
      %p165 = scmp.eq.s32.totalorder %s22, 1
      %p166 = scmp.ne.s32.totalorder %s161, %s163
      %p167 = scmp.eq.s32.totalorder %s22, 0
      %p168 = por %p166, %p167
      %p169 = scmp.ne.s32.totalorder %s161, %s163
      %p170 = scmp.eq.s32.totalorder %s27, 1
      %p171 = por %p169, %p170
      %p172 = scmp.ne.s32.totalorder %s163, %s164
      %p173 = scmp.eq.s32.totalorder %s27, 0
      %p174 = por %p172, %p173
      %p175 = scmp.ne.s32.totalorder %s163, %s164
      %p176 = scmp.eq.s32.totalorder %s28, 1
      %p177 = por %p175, %p176
      %p179 = scmp.ne.s32.totalorder %s164, %s178
      %p180 = scmp.eq.s32.totalorder %s28, 0
      %p181 = por %p179, %p180
      %s183 = sadd.s32 %s182, 1
      %p186 = scmp.eq.s32.totalorder %s22, 1
      %p187 = scmp.ne.s32.totalorder %s182, %s184
      %p188 = scmp.eq.s32.totalorder %s22, 0
      %p189 = por %p187, %p188
      %p190 = scmp.ne.s32.totalorder %s182, %s184
      %p191 = scmp.eq.s32.totalorder %s27, 1
      %p192 = por %p190, %p191
      %p193 = scmp.ne.s32.totalorder %s184, %s185
      %p194 = scmp.eq.s32.totalorder %s27, 0
      %p195 = por %p193, %p194
      %p196 = scmp.ne.s32.totalorder %s184, %s185
      %p197 = scmp.eq.s32.totalorder %s28, 1
      %p198 = por %p196, %p197
      %p200 = scmp.ne.s32.totalorder %s185, %s199
      %p201 = scmp.eq.s32.totalorder %s28, 0
      %p202 = por %p200, %p201
      %s203 = ssub.s32 %s22, %s29
      %p204 = scmp.eq.s32.totalorder %s203, 0
      %s206 = sadd.s32 %s205, 1
      %s207 = scalar_select %p204, %s205, %s206
      %p210 = pneg %p204
      %p211 = scmp.eq.s32.totalorder %s22, 1
      %p212 = por %p210, %p211
      %p213 = scmp.ne.s32.totalorder %s205, %s208
      %p214 = scmp.eq.s32.totalorder %s22, 0
      %p215 = por %p213, %p214
      %p216 = scmp.ne.s32.totalorder %s205, %s208
      %p217 = scmp.eq.s32.totalorder %s27, 1
      %p218 = por %p216, %p217
      %p219 = scmp.ne.s32.totalorder %s208, %s209
      %p220 = scmp.eq.s32.totalorder %s27, 0
      %p221 = por %p219, %p220
      %p222 = scmp.ne.s32.totalorder %s208, %s209
      %p223 = scmp.eq.s32.totalorder %s28, 1
      %p224 = por %p222, %p223
      %p226 = scmp.ne.s32.totalorder %s209, %s225
      %p227 = scmp.eq.s32.totalorder %s28, 0
      %p228 = por %p226, %p227
      %p229 = scmp.le.s32.totalorder 1, %s22
      %p230 = scmp.lt.s32.totalorder %s22, 3
      %p231 = pnand %p229, %p230
      %p232 = pneg %p231
      // Predicated region
      $region9: #{tpu_custom_call.1} parent=5 // pred_check
        _
      $region10: #{tpu_custom_call.1} parent=5 // pred_check_branch
        %234 = sbr.rel (%p231) target = $region12
      $region11: #{tpu_custom_call.1} parent=5 // pred_region
        %s235 = ssub.s32 %s22, 1
        // Predicated region
        $region13: #{tpu_custom_call.1} parent=11 // pred_check
          %p236 = pneg %p69
        $region14: #{tpu_custom_call.1} parent=11 // pred_check_branch
          %238 = sbr.rel (%p236) target = $region16
        $region15: #{tpu_custom_call.1} parent=11 // pred_region
          %s240 = ssub.s32 128, 128
          %241 = vsyncadd [#allocation6], %s240
          %s243 = sshll.u32 [#allocation5], 4
          %s244 = int_to_ptr.vmem [resolvable:$true] %s243
          %246 = dma.hbm_to_vmem [thread:$0]  %s1, 128, %s244, [#allocation6]
        $region16: #{tpu_custom_call.1} parent=11 // pred_fallthru
          _
        // Predicated region
        $region17: #{tpu_custom_call.1} parent=11 // pred_check
          %p247 = pneg %p90
        $region18: #{tpu_custom_call.1} parent=11 // pred_check_branch
          %249 = sbr.rel (%p247) target = $region20
        $region19: #{tpu_custom_call.1} parent=11 // pred_region
          %s251 = ssub.s32 256, 256
          %252 = vsyncadd [#allocation6], %s251
          %s253 = sshll.u32 [#allocation7], 4
          %s254 = int_to_ptr.vmem [resolvable:$true] %s253
          %259 = dma.hbm_to_vmem [thread:$0]  %s2, 256, %s254, [#allocation6], 64, 64, 4
        $region20: #{tpu_custom_call.1} parent=11 // pred_fallthru
          _
        // Predicated region
        $region21: #{tpu_custom_call.1} parent=11 // pred_check
          %p260 = pneg %p111
        $region22: #{tpu_custom_call.1} parent=11 // pred_check_branch
          %262 = sbr.rel (%p260) target = $region24
        $region23: #{tpu_custom_call.1} parent=11 // pred_region
          _
        $region24: #{tpu_custom_call.1} parent=11 // pred_fallthru
          _
        // Predicated region
        $region25: #{tpu_custom_call.1} parent=11 // pred_check
          %p263 = pneg %p132
        $region26: #{tpu_custom_call.1} parent=11 // pred_check_branch
          %265 = sbr.rel (%p263) target = $region28
        $region27: #{tpu_custom_call.1} parent=11 // pred_region
          %s267 = ssub.s32 256, 256
          %268 = vsyncadd [#allocation9], %s267
          %s269 = sshll.u32 [#allocation8], 4
          %s270 = int_to_ptr.vmem [resolvable:$true] %s269
          %275 = dma.hbm_to_vmem [thread:$0]  %s4, 256, %s270, [#allocation9], 64, 64, 4
        $region28: #{tpu_custom_call.1} parent=11 // pred_fallthru
          _
        // Predicated region
        $region29: #{tpu_custom_call.1} parent=11 // pred_check
          %p276 = pneg %p153
        $region30: #{tpu_custom_call.1} parent=11 // pred_check_branch
          %278 = sbr.rel (%p276) target = $region32
        $region31: #{tpu_custom_call.1} parent=11 // pred_region
          _
        $region32: #{tpu_custom_call.1} parent=11 // pred_fallthru
          _
        // Predicated region
        $region33: #{tpu_custom_call.1} parent=11 // pred_check
          %p279 = pneg %p174
        $region34: #{tpu_custom_call.1} parent=11 // pred_check_branch
          %281 = sbr.rel (%p279) target = $region36
        $region35: #{tpu_custom_call.1} parent=11 // pred_region
          _
        $region36: #{tpu_custom_call.1} parent=11 // pred_fallthru
          _
        // Predicated region
        $region37: #{tpu_custom_call.1} parent=11 // pred_check
          %p282 = pneg %p195
        $region38: #{tpu_custom_call.1} parent=11 // pred_check_branch
          %284 = sbr.rel (%p282) target = $region40
        $region39: #{tpu_custom_call.1} parent=11 // pred_region
          _
        $region40: #{tpu_custom_call.1} parent=11 // pred_fallthru
          _
      $region12: #{tpu_custom_call.1} parent=5 // pred_fallthru
        _
      %p285 = scmp.lt.s32.totalorder %s22, 2
      // Predicated region
      $region41: #{tpu_custom_call.1} parent=5 // pred_check
        %p286 = pneg %p285
      $region42: #{tpu_custom_call.1} parent=5 // pred_check_branch
        %288 = sbr.rel (%p286) target = $region44
      $region43: #{tpu_custom_call.1} parent=5 // pred_region
        // Predicated region
        $region45: #{tpu_custom_call.1} parent=43 // pred_check
          %p289 = pneg %p42
        $region46: #{tpu_custom_call.1} parent=43 // pred_check_branch
          %291 = sbr.rel (%p289) target = $region48
        $region47: #{tpu_custom_call.1} parent=43 // pred_region
          %s292 = sand.u32 %s32, 1
          %s293 = scalar_lea.sflag [#allocation3], %s292
          %s294 = sand.u32 %s32, 1
          %s295 = smul.addr %s294, 8
          %s296 = scalar_lea.vmem [#allocation2], %s295
          %s298 = ssub.s32 128, 128
          %299 = vsyncadd %s293, %s298
          %s300 = smul.addr %s22, 128
          %s301 = scalar_lea.hbm %s0, %s300
          %s303 = sshll.u32 %s296, 4
          %s304 = int_to_ptr.vmem [resolvable:$true] %s303
          %306 = dma.hbm_to_vmem [thread:$0]  %s301, 128, %s304, %s293
        $region48: #{tpu_custom_call.1} parent=43 // pred_fallthru
          _
      $region44: #{tpu_custom_call.1} parent=5 // pred_fallthru
        _
      %p307 = scmp.le.s32.totalorder 1, %s22
      %p308 = scmp.lt.s32.totalorder %s22, 3
      %p309 = pnand %p307, %p308
      %p310 = pneg %p309
      // Predicated region
      $region49: #{tpu_custom_call.1} parent=5 // pred_check
        _
      $region50: #{tpu_custom_call.1} parent=5 // pred_check_branch
        %312 = sbr.rel (%p309) target = $region52
      $region51: #{tpu_custom_call.1} parent=5 // pred_region
        %s313 = ssub.s32 %s22, 1
        %s314 = sand.u32 %s35, 1
        %s315 = scalar_lea.sflag [#allocation3], %s314
        %s316 = sand.u32 %s35, 1
        %s317 = smul.addr %s316, 8
        %s318 = scalar_lea.vmem [#allocation2], %s317
        // Predicated region
        $region53: #{tpu_custom_call.1} parent=51 // pred_check
          %p319 = pneg %p48
        $region54: #{tpu_custom_call.1} parent=51 // pred_check_branch
          %321 = sbr.rel (%p319) target = $region56
        $region55: #{tpu_custom_call.1} parent=51 // pred_region
          %322 = dma.done %s315, 128
        $region56: #{tpu_custom_call.1} parent=51 // pred_fallthru
          _
        // Predicated region
        $region57: #{tpu_custom_call.1} parent=51 // pred_check
          %p323 = pneg %p69
        $region58: #{tpu_custom_call.1} parent=51 // pred_check_branch
          %325 = sbr.rel (%p323) target = $region60
        $region59: #{tpu_custom_call.1} parent=51 // pred_region
          %326 = dma.done [#allocation6], 128
        $region60: #{tpu_custom_call.1} parent=51 // pred_fallthru
          _
        // Predicated region
        $region61: #{tpu_custom_call.1} parent=51 // pred_check
          %p327 = pneg %p90
        $region62: #{tpu_custom_call.1} parent=51 // pred_check_branch
          %329 = sbr.rel (%p327) target = $region64
        $region63: #{tpu_custom_call.1} parent=51 // pred_region
          %330 = dma.done [#allocation6], 256
        $region64: #{tpu_custom_call.1} parent=51 // pred_fallthru
          _
        // Predicated region
        $region65: #{tpu_custom_call.1} parent=51 // pred_check
          %p331 = pneg %p132
        $region66: #{tpu_custom_call.1} parent=51 // pred_check_branch
          %333 = sbr.rel (%p331) target = $region68
        $region67: #{tpu_custom_call.1} parent=51 // pred_region
          %334 = dma.done [#allocation9], 256
        $region68: #{tpu_custom_call.1} parent=51 // pred_fallthru
          _
        %s335 = sand.u32 %s35, 1
        %s336 = scalar_lea.sflag [#allocation3], %s335
        %s337 = sand.u32 %s35, 1
        %s338 = smul.addr %s337, 8
        %s339 = scalar_lea.vmem [#allocation2], %s338
        %p340 = pneg %p48
        %p341 = pneg %p45
        %p342 = pneg %p69
        %p343 = pneg %p66
        %p344 = pneg %p90
        %p345 = pneg %p87
        %p346 = pneg %p111
        %p347 = pneg %p108
        %p348 = pneg %p132
        %p349 = pneg %p129
        %p350 = pneg %p153
        %p351 = pneg %p150
        %p352 = pneg %p174
        %p353 = pneg %p171
        %p354 = pneg %p195
        %p355 = pneg %p192
        %p356 = pneg %p221
        %p357 = pneg %p218
        %s358 = sand.u32 %s208, 1
        %s359 = scalar_lea.sflag [#allocation4], %s358
        %s360 = sand.u32 %s208, 1
        %s361 = smul.addr %s360, 8
        %s362 = scalar_lea.vmem [#allocation10], %s361
        %v364 = vld [vmem:[%s318] sm:$0xff]
        %v365 = vpack.c.bf16 %v364, %v364
        %v366 = vld [vmem:[#allocation7] sm:$0xf]
        %v367 = vld [vmem:[#allocation7 + $0x4] sm:$0xf]
        %v368 = vld [vmem:[#allocation7 + $0x8] sm:$0xf]
        %v369 = vld [vmem:[#allocation7 + $0xc] sm:$0xf]
        %v370 = vld [vmem:[%s3] sm:$0x1]
        %v372 = vlaneseq
        %v373 = vshrl.u32 %v372, 7
        %v374 = vsub.s32 0, %v373
        %v375 = vrot.slane %v370, %v374
        %v381 = vunpack.c.l.b16 %v366
        %v382 = vunpack.c.l.b16 %v367
        %v383 = vunpack.c.l.b16 %v368
        %v384 = vunpack.c.l.b16 %v369
        %v385 = vpack.c.b16 %v382, %v381
        %v386 = vpack.c.b16 %v384, %v383
        %vm389 = vcmask 261120
        %v391 = vsel %vm389, %v365, 0
        %393 = vmatprep.subr.bf16.mxu0 0
        %394 = vmatpush1.bf16.msra.mxu0 %v385
        %395 = vmatprep.subr.bf16.mxu0 0
        %396 = vmatpush1.bf16.msra.mxu0 %v386
        %397 = vmatprep.subr.bf16.mxu0 0
        %398 = vmatpush1.bf16.msra.mxu0 0
        %399 = vmatprep.subr.bf16.mxu0 0
        %400 = vmatpush1.bf16.msra.mxu0 0
        %401 = vmatprep.subr.bf16.mxu0 0
        %402 = vmatpush1.bf16.msra.mxu0 0
        %403 = vmatprep.subr.bf16.mxu0 0
        %404 = vmatpush1.bf16.msra.mxu0 0
        %405 = vmatprep.subr.bf16.mxu0 0
        %406 = vmatpush1.bf16.msra.mxu0 0
        %407 = vmatprep.subr.bf16.mxu0 0
        %408 = vmatpush1.bf16.msra.mxu0 0
        %409 = vmatprep.subr.bf16.mxu0 0
        %410 = vmatpush1.bf16.msra.mxu0 0
        %411 = vmatprep.subr.bf16.mxu0 0
        %412 = vmatpush1.bf16.msra.mxu0 0
        %413 = vmatprep.subr.bf16.mxu0 0
        %414 = vmatpush1.bf16.msra.mxu0 0
        %415 = vmatprep.subr.bf16.mxu0 0
        %416 = vmatpush1.bf16.msra.mxu0 0
        %417 = vmatprep.subr.bf16.mxu0 0
        %418 = vmatpush1.bf16.msra.mxu0 0
        %419 = vmatprep.subr.bf16.mxu0 0
        %420 = vmatpush1.bf16.msra.mxu0 0
        %421 = vmatprep.subr.bf16.mxu0 0
        %422 = vmatpush1.bf16.msra.mxu0 0
        %423 = vmatprep.subr.bf16.mxu0 0
        %424 = vmatpush1.bf16.msra.mxu0 0
        %425 = vmatprep.mubr.bf16.mxu0 0
        %426 = vmatmul.mubr.bf16.gmra.mrb[0].mxu0 %v391
        %v427 = vpop.f32.mrb[0].mxu0
        %v428 = vadd.f32 %v375, %v427
        %v429 = vpop.f32.mrb[0].mxu0
        %v430 = vpop.f32.mrb[0].mxu0
        %v431 = vpop.f32.mrb[0].mxu0
        %432 = vdwg.mxu0
        %v433 = vpack.c.bf16 %v428, %v428
        %435 = vrot.lane.b32.xlu0 %v433, 112
        %v436 = vpop.permute.xlu0 %435
        %437 = vrot.lane.b32.xlu0 %v433, 96
        %v438 = vpop.permute.xlu0 %437
        %439 = vrot.lane.b32.xlu0 %v433, 80
        %v440 = vpop.permute.xlu0 %439
        %441 = vrot.lane.b32.xlu0 %v433, 64
        %v442 = vpop.permute.xlu0 %441
        %443 = vrot.lane.b32.xlu0 %v433, 48
        %v444 = vpop.permute.xlu0 %443
        %v445 = vld [vmem:[#allocation5] sm:$0xff]
        %vm446 = vcmask 130048
        %v448 = vsel %vm446, %v433, 0
        %v451 = vsel %vm446, %v438, 0
        %453 = vmatprep.subr.bf16.mxu0 0
        %454 = vmatpush1.bf16.xpose.msra.mxu0 %v451
        %455 = vmatprep.subr.bf16.mxu0 0
        %456 = vmatpush1.bf16.xpose.msra.mxu0 0
        %457 = vmatprep.subr.bf16.mxu0 0
        %458 = vmatpush1.bf16.xpose.msra.mxu0 0
        %459 = vmatprep.subr.bf16.mxu0 0
        %460 = vmatpush1.bf16.xpose.msra.mxu0 0
        %461 = vmatprep.subr.bf16.mxu0 0
        %462 = vmatpush1.bf16.xpose.msra.mxu0 0
        %463 = vmatprep.subr.bf16.mxu0 0
        %464 = vmatpush1.bf16.xpose.msra.mxu0 0
        %465 = vmatprep.subr.bf16.mxu0 0
        %466 = vmatpush1.bf16.xpose.msra.mxu0 0
        %467 = vmatprep.subr.bf16.mxu0 0
        %468 = vmatpush1.bf16.xpose.msra.mxu0 0
        %469 = vmatprep.subr.bf16.mxu0 0
        %470 = vmatpush1.bf16.xpose.msra.mxu0 0
        %471 = vmatprep.subr.bf16.mxu0 0
        %472 = vmatpush1.bf16.xpose.msra.mxu0 0
        %473 = vmatprep.subr.bf16.mxu0 0
        %474 = vmatpush1.bf16.xpose.msra.mxu0 0
        %475 = vmatprep.subr.bf16.mxu0 0
        %476 = vmatpush1.bf16.xpose.msra.mxu0 0
        %477 = vmatprep.subr.bf16.mxu0 0
        %478 = vmatpush1.bf16.xpose.msra.mxu0 0
        %479 = vmatprep.subr.bf16.mxu0 0
        %480 = vmatpush1.bf16.xpose.msra.mxu0 0
        %481 = vmatprep.subr.bf16.mxu0 0
        %482 = vmatpush1.bf16.xpose.msra.mxu0 0
        %483 = vmatprep.subr.bf16.mxu0 0
        %484 = vmatpush1.bf16.xpose.msra.mxu0 0
        %485 = vmatprep.mubr.bf16.mxu0 0
        %486 = vmatmul.mubr.bf16.gmra.mrb[0].mxu0 %v448
        %v487 = vpop.f32.mrb[0].mxu0
        %v488 = vadd.f32 %v445, %v487
        %v489 = vpop.f32.mrb[0].mxu0
        %v490 = vpop.f32.mrb[0].mxu0
        %v491 = vpop.f32.mrb[0].mxu0
        %492 = vdwg.mxu0
        %v494 = vsel %vm446, %v436, 0
        %v497 = vsel %vm446, %v440, 0
        %499 = vmatprep.subr.bf16.mxu0 0
        %500 = vmatpush1.bf16.xpose.msra.mxu0 %v497
        %501 = vmatprep.subr.bf16.mxu0 0
        %502 = vmatpush1.bf16.xpose.msra.mxu0 0
        %503 = vmatprep.subr.bf16.mxu0 0
        %504 = vmatpush1.bf16.xpose.msra.mxu0 0
        %505 = vmatprep.subr.bf16.mxu0 0
        %506 = vmatpush1.bf16.xpose.msra.mxu0 0
        %507 = vmatprep.subr.bf16.mxu0 0
        %508 = vmatpush1.bf16.xpose.msra.mxu0 0
        %509 = vmatprep.subr.bf16.mxu0 0
        %510 = vmatpush1.bf16.xpose.msra.mxu0 0
        %511 = vmatprep.subr.bf16.mxu0 0
        %512 = vmatpush1.bf16.xpose.msra.mxu0 0
        %513 = vmatprep.subr.bf16.mxu0 0
        %514 = vmatpush1.bf16.xpose.msra.mxu0 0
        %515 = vmatprep.subr.bf16.mxu0 0
        %516 = vmatpush1.bf16.xpose.msra.mxu0 0
        %517 = vmatprep.subr.bf16.mxu0 0
        %518 = vmatpush1.bf16.xpose.msra.mxu0 0
        %519 = vmatprep.subr.bf16.mxu0 0
        %520 = vmatpush1.bf16.xpose.msra.mxu0 0
        %521 = vmatprep.subr.bf16.mxu0 0
        %522 = vmatpush1.bf16.xpose.msra.mxu0 0
        %523 = vmatprep.subr.bf16.mxu0 0
        %524 = vmatpush1.bf16.xpose.msra.mxu0 0
        %525 = vmatprep.subr.bf16.mxu0 0
        %526 = vmatpush1.bf16.xpose.msra.mxu0 0
        %527 = vmatprep.subr.bf16.mxu0 0
        %528 = vmatpush1.bf16.xpose.msra.mxu0 0
        %529 = vmatprep.subr.bf16.mxu0 0
        %530 = vmatpush1.bf16.xpose.msra.mxu0 0
        %531 = vmatprep.mubr.bf16.mxu0 0
        %532 = vmatmul.mubr.bf16.gmra.mrb[0].mxu0 %v494
        %v533 = vpop.f32.mrb[0].mxu0
        %v534 = vadd.f32 %v445, %v533
        %v535 = vpop.f32.mrb[0].mxu0
        %v536 = vpop.f32.mrb[0].mxu0
        %v537 = vpop.f32.mrb[0].mxu0
        %538 = vdwg.mxu0
        %vm539 = vcmask 64512
        %v540 = vsel %vm539, %v488, -inf
        %541 = vmax.xlane.f32.xlu0 %v540
        %v542 = vpop.xlane.xlu0 %541
        %v543 = vsel %vm539, %v534, -inf
        %544 = vmax.xlane.f32.xlu0 %v543
        %v545 = vpop.xlane.xlu0 %544
        %v546 = vsub.f32 %v488, %v542
        %v547 = vsub.f32 %v534, %v545
        %v548 = vmul.f32 %v546, 1.442695
        %v549 = vpow.pop %v548
        %v550 = vmul.f32 %v547, 1.442695
        %v551 = vpow.pop %v550
        %v552 = vsel %vm539, %v549, 0.0
        %553 = vadd.xlane.f32.xlu0 %v552
        %v554 = vpop.xlane.xlu0 %553
        %v555 = vsel %vm539, %v551, 0.0
        %556 = vadd.xlane.f32.xlu0 %v555
        %v557 = vpop.xlane.xlu0 %556
        %v558 = vrcp.pop %v554
        %v559 = vrcp.pop %v557
        %v560 = vpack.c.bf16 %v549, %v549
        %v561 = vpack.c.bf16 %v551, %v551
        %v563 = vsel %vm539, %v560, 0
        %vm565 = vcmask 1043456
        %v567 = vsel %vm565, %v442, 0
        %569 = vmatprep.subr.bf16.mxu0 0
        %570 = vmatpush1.bf16.msra.mxu0 %v567
        %571 = vmatprep.subr.bf16.mxu0 0
        %572 = vmatpush1.bf16.msra.mxu0 0
        %573 = vmatprep.subr.bf16.mxu0 0
        %574 = vmatpush1.bf16.msra.mxu0 0
        %575 = vmatprep.subr.bf16.mxu0 0
        %576 = vmatpush1.bf16.msra.mxu0 0
        %577 = vmatprep.subr.bf16.mxu0 0
        %578 = vmatpush1.bf16.msra.mxu0 0
        %579 = vmatprep.subr.bf16.mxu0 0
        %580 = vmatpush1.bf16.msra.mxu0 0
        %581 = vmatprep.subr.bf16.mxu0 0
        %582 = vmatpush1.bf16.msra.mxu0 0
        %583 = vmatprep.subr.bf16.mxu0 0
        %584 = vmatpush1.bf16.msra.mxu0 0
        %585 = vmatprep.subr.bf16.mxu0 0
        %586 = vmatpush1.bf16.msra.mxu0 0
        %587 = vmatprep.subr.bf16.mxu0 0
        %588 = vmatpush1.bf16.msra.mxu0 0
        %589 = vmatprep.subr.bf16.mxu0 0
        %590 = vmatpush1.bf16.msra.mxu0 0
        %591 = vmatprep.subr.bf16.mxu0 0
        %592 = vmatpush1.bf16.msra.mxu0 0
        %593 = vmatprep.subr.bf16.mxu0 0
        %594 = vmatpush1.bf16.msra.mxu0 0
        %595 = vmatprep.subr.bf16.mxu0 0
        %596 = vmatpush1.bf16.msra.mxu0 0
        %597 = vmatprep.subr.bf16.mxu0 0
        %598 = vmatpush1.bf16.msra.mxu0 0
        %599 = vmatprep.subr.bf16.mxu0 0
        %600 = vmatpush1.bf16.msra.mxu0 0
        %601 = vmatprep.mubr.bf16.mxu0 0
        %602 = vmatmul.mubr.bf16.gmra.mrb[0].mxu0 %v563
        %v603 = vpop.f32.mrb[0].mxu0
        %v604 = vadd.f32 0.0, %v603
        %v605 = vpop.f32.mrb[0].mxu0
        %v606 = vpop.f32.mrb[0].mxu0
        %v607 = vpop.f32.mrb[0].mxu0
        %608 = vdwg.mxu0
        %v610 = vsel %vm539, %v561, 0
        %v613 = vsel %vm565, %v444, 0
        %615 = vmatprep.subr.bf16.mxu0 0
        %616 = vmatpush1.bf16.msra.mxu0 %v613
        %617 = vmatprep.subr.bf16.mxu0 0
        %618 = vmatpush1.bf16.msra.mxu0 0
        %619 = vmatprep.subr.bf16.mxu0 0
        %620 = vmatpush1.bf16.msra.mxu0 0
        %621 = vmatprep.subr.bf16.mxu0 0
        %622 = vmatpush1.bf16.msra.mxu0 0
        %623 = vmatprep.subr.bf16.mxu0 0
        %624 = vmatpush1.bf16.msra.mxu0 0
        %625 = vmatprep.subr.bf16.mxu0 0
        %626 = vmatpush1.bf16.msra.mxu0 0
        %627 = vmatprep.subr.bf16.mxu0 0
        %628 = vmatpush1.bf16.msra.mxu0 0
        %629 = vmatprep.subr.bf16.mxu0 0
        %630 = vmatpush1.bf16.msra.mxu0 0
        %631 = vmatprep.subr.bf16.mxu0 0
        %632 = vmatpush1.bf16.msra.mxu0 0
        %633 = vmatprep.subr.bf16.mxu0 0
        %634 = vmatpush1.bf16.msra.mxu0 0
        %635 = vmatprep.subr.bf16.mxu0 0
        %636 = vmatpush1.bf16.msra.mxu0 0
        %637 = vmatprep.subr.bf16.mxu0 0
        %638 = vmatpush1.bf16.msra.mxu0 0
        %639 = vmatprep.subr.bf16.mxu0 0
        %640 = vmatpush1.bf16.msra.mxu0 0
        %641 = vmatprep.subr.bf16.mxu0 0
        %642 = vmatpush1.bf16.msra.mxu0 0
        %643 = vmatprep.subr.bf16.mxu0 0
        %644 = vmatpush1.bf16.msra.mxu0 0
        %645 = vmatprep.subr.bf16.mxu0 0
        %646 = vmatpush1.bf16.msra.mxu0 0
        %647 = vmatprep.mubr.bf16.mxu0 0
        %648 = vmatmul.mubr.bf16.gmra.mrb[0].mxu0 %v610
        %v649 = vpop.f32.mrb[0].mxu0
        %v650 = vadd.f32 0.0, %v649
        %v651 = vpop.f32.mrb[0].mxu0
        %v652 = vpop.f32.mrb[0].mxu0
        %v653 = vpop.f32.mrb[0].mxu0
        %654 = vdwg.mxu0
        %v655 = vmul.f32 %v604, %v558
        %v656 = vmul.f32 %v650, %v559
        %v657 = vpack.c.bf16 %v655, %v655
        %v658 = vpack.c.bf16 %v656, %v656
        %660 = vrot.lane.b32.xlu0 %v658, 16
        %v661 = vpop.permute.xlu0 %660
        %v664 = vsel %vm446, %v657, %v661
        %v665 = vld [vmem:[#allocation8] sm:$0xf]
        %v666 = vld [vmem:[#allocation8 + $0x4] sm:$0xf]
        %v667 = vld [vmem:[#allocation8 + $0x8] sm:$0xf]
        %v668 = vld [vmem:[#allocation8 + $0xc] sm:$0xf]
        %v669 = vld [vmem:[%s5] sm:$0x1]
        %v671 = vlaneseq
        %v672 = vshrl.u32 %v671, 7
        %v673 = vsub.s32 0, %v672
        %v674 = vrot.slane %v669, %v673
        %v680 = vunpack.c.l.b16 %v665
        %v681 = vunpack.c.l.b16 %v666
        %v682 = vunpack.c.l.b16 %v667
        %v683 = vunpack.c.l.b16 %v668
        %v684 = vpack.c.b16 %v681, %v680
        %v685 = vpack.c.b16 %v683, %v682
        %v688 = vsel %vm389, %v664, 0
        %690 = vmatprep.subr.bf16.mxu0 0
        %691 = vmatpush1.bf16.msra.mxu0 %v684
        %692 = vmatprep.subr.bf16.mxu0 0
        %693 = vmatpush1.bf16.msra.mxu0 %v685
        %694 = vmatprep.subr.bf16.mxu0 0
        %695 = vmatpush1.bf16.msra.mxu0 0
        %696 = vmatprep.subr.bf16.mxu0 0
        %697 = vmatpush1.bf16.msra.mxu0 0
        %698 = vmatprep.subr.bf16.mxu0 0
        %699 = vmatpush1.bf16.msra.mxu0 0
        %700 = vmatprep.subr.bf16.mxu0 0
        %701 = vmatpush1.bf16.msra.mxu0 0
        %702 = vmatprep.subr.bf16.mxu0 0
        %703 = vmatpush1.bf16.msra.mxu0 0
        %704 = vmatprep.subr.bf16.mxu0 0
        %705 = vmatpush1.bf16.msra.mxu0 0
        %706 = vmatprep.subr.bf16.mxu0 0
        %707 = vmatpush1.bf16.msra.mxu0 0
        %708 = vmatprep.subr.bf16.mxu0 0
        %709 = vmatpush1.bf16.msra.mxu0 0
        %710 = vmatprep.subr.bf16.mxu0 0
        %711 = vmatpush1.bf16.msra.mxu0 0
        %712 = vmatprep.subr.bf16.mxu0 0
        %713 = vmatpush1.bf16.msra.mxu0 0
        %714 = vmatprep.subr.bf16.mxu0 0
        %715 = vmatpush1.bf16.msra.mxu0 0
        %716 = vmatprep.subr.bf16.mxu0 0
        %717 = vmatpush1.bf16.msra.mxu0 0
        %718 = vmatprep.subr.bf16.mxu0 0
        %719 = vmatpush1.bf16.msra.mxu0 0
        %720 = vmatprep.subr.bf16.mxu0 0
        %721 = vmatpush1.bf16.msra.mxu0 0
        %722 = vmatprep.mubr.bf16.mxu0 0
        %723 = vmatmul.mubr.bf16.gmra.mrb[0].mxu0 %v688
        %v724 = vpop.f32.mrb[0].mxu0
        %v725 = vadd.f32 %v674, %v724
        %v726 = vpop.f32.mrb[0].mxu0
        %v727 = vpop.f32.mrb[0].mxu0
        %v728 = vpop.f32.mrb[0].mxu0
        %729 = vdwg.mxu0
        %v730 = vadd.f32 %v725, %v364
        %v731 = vsel %vm389, %v730, 0.0
        %732 = vadd.xlane.f32.xlu0 %v731
        %v733 = vpop.xlane.xlu0 %732
        %v734 = vrcp.pop 32.0
        %v735 = vmul.f32 %v733, %v734
        %v736 = vsub.f32 %v730, %v735
        %v737 = vmul.f32 %v736, %v736
        %v738 = vsel %vm389, %v737, 0.0
        %739 = vadd.xlane.f32.xlu0 %v738
        %v740 = vpop.xlane.xlu0 %739
        %v741 = vmul.f32 %v740, %v734
        %v742 = vadd.f32 %v741, 1e-05
        %v743 = vrsqrt.pop %v742
        %v744 = vmul.f32 %v736, %v743
        %v745 = vld [vmem:[%s6] sm:$0x1]
        %v747 = vlaneseq
        %v748 = vshrl.u32 %v747, 7
        %v749 = vsub.s32 0, %v748
        %v750 = vrot.slane %v745, %v749
        %v752 = vmul.f32 %v744, %v750
        %v753 = vld [vmem:[%s7] sm:$0x1]
        %v755 = vlaneseq
        %v756 = vshrl.u32 %v755, 7
        %v757 = vsub.s32 0, %v756
        %v758 = vrot.slane %v753, %v757
        %v760 = vadd.f32 %v752, %v758
        %761 = vst.msk [vmem:[%s362] sm:$0xff] %vm389, %v760
        %s762 = sand.u32 %s208, 1
        %s763 = scalar_lea.sflag [#allocation4], %s762
        %s764 = sand.u32 %s208, 1
        %s765 = smul.addr %s764, 8
        %s766 = scalar_lea.vmem [#allocation10], %s765
        // Predicated region
        $region69: #{tpu_custom_call.1} parent=51 // pred_check
          %p767 = pneg %p218
        $region70: #{tpu_custom_call.1} parent=51 // pred_check_branch
          %769 = sbr.rel (%p767) target = $region72
        $region71: #{tpu_custom_call.1} parent=51 // pred_region
          %s771 = ssub.s32 128, 128
          %772 = vsyncadd %s763, %s771
          %s773 = smul.addr %s27, 128
          %s774 = scalar_lea.hbm %s8, %s773
          %s776 = sshll.u32 %s766, 4
          %s777 = int_to_ptr.vmem [resolvable:$true] %s776
          %779 = dma.vmem_to_hbm [thread:$0]  %s777, 128, %s774, %s763
        $region72: #{tpu_custom_call.1} parent=51 // pred_fallthru
          _
      $region52: #{tpu_custom_call.1} parent=5 // pred_fallthru
        _
      %p780 = scmp.le.s32.totalorder 2, %s22
      // Predicated region
      $region73: #{tpu_custom_call.1} parent=5 // pred_check
        %p781 = pneg %p780
      $region74: #{tpu_custom_call.1} parent=5 // pred_check_branch
        %783 = sbr.rel (%p781) target = $region76
      $region75: #{tpu_custom_call.1} parent=5 // pred_region
        %s784 = ssub.s32 %s22, 2
        // Predicated region
        $region77: #{tpu_custom_call.1} parent=75 // pred_check
          %p785 = pneg %p224
        $region78: #{tpu_custom_call.1} parent=75 // pred_check_branch
          %787 = sbr.rel (%p785) target = $region80
        $region79: #{tpu_custom_call.1} parent=75 // pred_region
          %s788 = sand.u32 %s209, 1
          %s789 = scalar_lea.sflag [#allocation4], %s788
          %s790 = sand.u32 %s209, 1
          %s791 = smul.addr %s790, 8
          %s792 = scalar_lea.vmem [#allocation10], %s791
          %793 = dma.done %s789, 128
        $region80: #{tpu_custom_call.1} parent=75 // pred_fallthru
          _
      $region76: #{tpu_custom_call.1} parent=5 // pred_fallthru
        _
    $region6: #{tpu_custom_call.1} parent=1 // loop_footer
      %s26 = sadd.s32 1, %s22
    $region7: #{tpu_custom_call.1} parent=1 // loop_footer_branch
      %21 = sbr.rel target = $region3
    $region8: #{tpu_custom_call.1} parent=1 // loop_exit
      _
    %794 = vsyncpa [#allocation3], 1
    %s795 = scalar_lea.sflag [#allocation3], 1
    %796 = vsyncpa %s795, 1
    %797 = vsyncpa [#allocation6], 1
    %798 = vsyncpa [#allocation9], 1
    %799 = vsyncpa [#allocation4], 1
    %s800 = scalar_lea.sflag [#allocation4], 1
    %801 = vsyncpa %s800, 1

</llo_original>
